<compile_context>
chip_gen: v5e
topology: v5e:2x2
jax: 0.10.0
libtpu: 0.0.40
codegen_flags: <defaults>
</compile_context>

<pallas_src>
import functools
import math

import jax
import jax.numpy as jnp
import numpy as np
from jax import lax
from jax.experimental import pallas as pl
from jax.experimental.pallas import tpu as pltpu


def mha_kernel(x_ref, wqkv_ref, bqkv_ref, wout_ref, bout_ref, mask_ref, out_ref,
               *, num_heads):
    """Fused MHA forward for one batch element (grid axis = batch, 'parallel')."""
    seq = x_ref.shape[1]
    d_model = x_ref.shape[2]
    hd = d_model // num_heads
    dt = x_ref.dtype

    x = x_ref[0]                                                 # (S, D)

    # QKV projection, f32 MXU accumulate. Wqkv is permuted to [Q | K | V] with heads
    # contiguous inside each block, and the 1/sqrt(hd) scale is pre-folded into the
    # Q columns (weights AND bias) wrapper-side.
    qkv = jnp.dot(x, wqkv_ref[...], preferred_element_type=jnp.float32)
    qkv = (qkv + bqkv_ref[...].astype(jnp.float32)).astype(dt)   # (S, 3D)

    mask = mask_ref[...].astype(jnp.float32)                     # (S, S), hoisted

    head_vals = []
    for h in range(num_heads):
        lo = h * hd
        q = qkv[:, lo:lo + hd]                                   # (S, hd)
        k = qkv[:, d_model + lo:d_model + lo + hd]               # (S, hd)
        v = qkv[:, 2 * d_model + lo:2 * d_model + lo + hd]       # (S, hd)

        # Scores contract the shared head dim directly (no materialized k.T).
        s = lax.dot_general(q, k, (((1,), (1,)), ((), ())),
                            preferred_element_type=jnp.float32)  # (S, S)
        s = s + mask                                             # additive mask
        m = jnp.max(s, axis=-1, keepdims=True)
        p = jnp.exp(s - m)
        attn = p / jnp.sum(p, axis=-1, keepdims=True)            # exact softmax
        head_vals.append(
            jnp.dot(attn.astype(dt), v,
                    preferred_element_type=jnp.float32).astype(dt))   # (S, hd)

    # Lane-concatenate heads -> (S, D) (matches torch head-major concat order), then a
    # single output projection with K = D (not H partial dots with K = hd).
    vals = jnp.concatenate(head_vals, axis=-1)                   # (S, D)
    out = jnp.dot(vals, wout_ref[...], preferred_element_type=jnp.float32)
    out = out + bout_ref[...].astype(jnp.float32)                # (S, D)
    out_ref[0] = out.astype(out_ref.dtype)


def _qkv_permutation(d_model, num_heads):
    """Column permutation making Q|K|V contiguous with heads contiguous inside each.

    Original nn.Linear packing (reshape(B,S,H,3*hd) + chunk): old col = h*3*hd + part*hd + j.
    New layout: new col = part*D + h*hd + j.
    """
    hd = d_model // num_heads
    return np.concatenate([
        np.arange(hd) + h * 3 * hd + part * hd
        for part in range(3)
        for h in range(num_heads)
    ])


def multi_head_attention(x, wqkv, bqkv, wout, bout, mask, *, num_heads):
    """x: (B,S,D); wqkv: (D,3D); bqkv: (1,3D); wout: (D,D); bout: (1,D); mask: (S,S)."""
    B, S, D = x.shape
    hd = D // num_heads

    # Wrapper-side weight preprocessing: permute to [Q|K|V] head-contiguous layout and
    # fold the 1/sqrt(hd) attention scale into the Q columns (weights + bias).
    perm = _qkv_permutation(D, num_heads)
    scale_vec = jnp.concatenate([
        jnp.full((D,), 1.0 / math.sqrt(hd), dtype=wqkv.dtype),
        jnp.ones((2 * D,), dtype=wqkv.dtype)])
    wqkv_p = wqkv[:, perm] * scale_vec[None, :]
    bqkv_p = bqkv[:, perm] * scale_vec[None, :]

    kernel = functools.partial(mha_kernel, num_heads=num_heads)

    itemsize = x.dtype.itemsize
    flops = B * (2 * S * D * 3 * D            # QKV projection
                 + 4 * num_heads * S * S * hd  # QK^T and attn@V over all heads
                 + 2 * S * D * D)              # output projection
    bytes_accessed = itemsize * (x.size + wqkv_p.size + bqkv_p.size + wout.size
                                 + bout.size + mask.size + B * S * D)

    # Weights / biases / mask: whole-array resident in VMEM, no per-step double-buffer.
    vmem_resident = pl.BlockSpec(memory_space=pltpu.MemorySpace.VMEM)

    out = pl.pallas_call(
        kernel,
        out_shape=jax.ShapeDtypeStruct((B, S, D), x.dtype),
        grid=(B,),
        in_specs=[
            pl.BlockSpec((1, S, D), lambda b: (b, 0, 0)),   # x: per-batch pipelined tile
            vmem_resident,                                  # Wqkv (permuted, Q-scaled)
            vmem_resident,                                  # bqkv (permuted, Q-scaled)
            vmem_resident,                                  # Wout
            vmem_resident,                                  # bout
            vmem_resident,                                  # additive mask (S, S)
        ],
        out_specs=pl.BlockSpec((1, S, D), lambda b: (b, 0, 0)),
        compiler_params=pltpu.CompilerParams(
            dimension_semantics=("parallel",),
            vmem_limit_bytes=32 * 1024 * 1024),
        cost_estimate=pl.CostEstimate(
            flops=flops,
            transcendentals=B * num_heads * S * S,
            bytes_accessed=bytes_accessed),
    )(x, wqkv_p, bqkv_p, wout, bout, mask)

    return out


def reference_mha(x, wqkv, bqkv, wout, bout, mask, *, num_heads):
    """Pure-JAX reference mirroring the PyTorch forward exactly (original layout)."""
    B, S, D = x.shape
    hd = D // num_heads
    qkv = x @ wqkv + bqkv[0]                               # (B, S, 3D)
    qkv = qkv.reshape(B, S, num_heads, 3 * hd)
    qkv = jnp.transpose(qkv, (0, 2, 1, 3))                 # (B, H, S, 3hd)
    q, k, v = jnp.split(qkv, 3, axis=-1)
    scaled = jnp.einsum('bhqd,bhkd->bhqk', q, k) / math.sqrt(hd)
    scaled = scaled + mask                                 # broadcast (S,S)
    attn = jax.nn.softmax(scaled, axis=-1)
    values = jnp.einsum('bhqk,bhkd->bhqd', attn, v)
    values = jnp.transpose(values, (0, 2, 1, 3)).reshape(B, S, D)
    return values @ wout + bout[0]


if __name__ == "__main__":
    # Keep both the kernel's and the reference's f32 matmuls at full precision so the
    # comparison isolates kernel correctness (not TPU default bf16-pass slop).
    jax.config.update("jax_default_matmul_precision", "highest")

    # Module config: input_dim == d_model == 32, num_heads = 4, seq = 8, batch = 2
    B, S, D, H = 2, 8, 32, 4

    key = jax.random.PRNGKey(0)
    kx, k1, k2, k3, k4 = jax.random.split(key, 5)

    x = jax.random.normal(kx, (B, S, D), dtype=jnp.float32)

    # nn.Linear-style deterministic init: uniform(-1/sqrt(fan_in), 1/sqrt(fan_in)),
    # stored as [in, out] so the kernel computes x @ W + b.
    bound_qkv = 1.0 / math.sqrt(D)
    wqkv = jax.random.uniform(k1, (D, 3 * D), jnp.float32, -bound_qkv, bound_qkv)
    bqkv = jax.random.uniform(k2, (1, 3 * D), jnp.float32, -bound_qkv, bound_qkv)
    bound_out = 1.0 / math.sqrt(D)
    wout = jax.random.uniform(k3, (D, D), jnp.float32, -bound_out, bound_out)
    bout = jax.random.uniform(k4, (1, D), jnp.float32, -bound_out, bound_out)

    # Additive causal mask (0 on/below diagonal, large negative above) — an example of
    # the arbitrary additive mask the module's forward() accepts.
    neg = -1e9
    mask = jnp.where(jnp.tril(jnp.ones((S, S), dtype=bool)), 0.0, neg).astype(jnp.float32)

    out = multi_head_attention(x, wqkv, bqkv, wout, bout, mask, num_heads=H)
    out = jax.block_until_ready(out)

    ref = reference_mha(x, wqkv, bqkv, wout, bout, mask, num_heads=H)
    assert out.shape == (B, S, D)
    assert jnp.allclose(out, ref, atol=2e-3, rtol=2e-3), "mismatch vs pure-JAX reference"

    print("KERNEL_OK")
</pallas_src>

<mosaic_0001>
module attributes {stable_mosaic.version = 11 : i64} {
  func.func @mha_kernel(%arg0: i32, %arg1: memref<1x8x32xf32, #tpu.memory_space<vmem>>, %arg2: memref<32x96xf32, #tpu.memory_space<vmem>>, %arg3: memref<1x96xf32, #tpu.memory_space<vmem>>, %arg4: memref<32x32xf32, #tpu.memory_space<vmem>>, %arg5: memref<1x32xf32, #tpu.memory_space<vmem>>, %arg6: memref<8x8xf32, #tpu.memory_space<vmem>>, %arg7: memref<1x8x32xf32, #tpu.memory_space<vmem>>) attributes {dimension_semantics = [#tpu.dimension_semantics<parallel>], iteration_bounds = array<i64: 2>, scalar_prefetch = 0 : i64, scratch_operands = 0 : i64, tpu.core_type = #tpu.core_type<tc>, window_params = [{transform_indices = @transform_0, window_bounds = array<i64: 1, 8, 32>}, {pipeline_mode = #tpu.pipeline_mode<synchronous>, transform_indices = @transform_1, window_bounds = array<i64: 32, 96>}, {pipeline_mode = #tpu.pipeline_mode<synchronous>, transform_indices = @transform_2, window_bounds = array<i64: 1, 96>}, {pipeline_mode = #tpu.pipeline_mode<synchronous>, transform_indices = @transform_3, window_bounds = array<i64: 32, 32>}, {pipeline_mode = #tpu.pipeline_mode<synchronous>, transform_indices = @transform_4, window_bounds = array<i64: 1, 32>}, {pipeline_mode = #tpu.pipeline_mode<synchronous>, transform_indices = @transform_5, window_bounds = array<i64: 8, 8>}, {transform_indices = @transform_6, window_bounds = array<i64: 1, 8, 32>}]} {
    %c0 = arith.constant 0 : index
    %c0_0 = arith.constant 0 : index
    %c0_1 = arith.constant 0 : index
    %0 = vector.load %arg1[%c0, %c0_0, %c0_1] : memref<1x8x32xf32, #tpu.memory_space<vmem>>, vector<1x8x32xf32>
    %1 = vector.shape_cast %0 : vector<1x8x32xf32> to vector<8x32xf32>
    %c0_2 = arith.constant 0 : index
    %c0_3 = arith.constant 0 : index
    %2 = vector.load %arg2[%c0_2, %c0_3] : memref<32x96xf32, #tpu.memory_space<vmem>>, vector<32x96xf32>
    %cst = arith.constant dense<0.000000e+00> : vector<8x96xf32>
    %3 = tpu.matmul %1, %2, %cst {dimension_numbers = #tpu.dot_dimension_numbers<[1], [0], [0], [1], [0, 0, 1, 1], [], []>, precision = #tpu.contract_precision<fp32>} : vector<8x32xf32>, vector<32x96xf32>, vector<8x96xf32> -> vector<8x96xf32>
    %c0_4 = arith.constant 0 : index
    %c0_5 = arith.constant 0 : index
    %4 = vector.load %arg3[%c0_4, %c0_5] : memref<1x96xf32, #tpu.memory_space<vmem>>, vector<1x96xf32>
    %5 = vector.broadcast %4 : vector<1x96xf32> to vector<8x96xf32>
    %6 = arith.addf %3, %5 : vector<8x96xf32>
    %c0_6 = arith.constant 0 : index
    %c0_7 = arith.constant 0 : index
    %7 = vector.load %arg6[%c0_6, %c0_7] : memref<8x8xf32, #tpu.memory_space<vmem>>, vector<8x8xf32>
    %8 = vector.extract_strided_slice %6 {offsets = [0, 0], sizes = [8, 8], strides = [1, 1]} : vector<8x96xf32> to vector<8x8xf32>
    %9 = vector.extract_strided_slice %6 {offsets = [0, 32], sizes = [8, 8], strides = [1, 1]} : vector<8x96xf32> to vector<8x8xf32>
    %10 = vector.extract_strided_slice %6 {offsets = [0, 64], sizes = [8, 8], strides = [1, 1]} : vector<8x96xf32> to vector<8x8xf32>
    %cst_8 = arith.constant dense<0.000000e+00> : vector<8x8xf32>
    %11 = tpu.matmul %8, %9, %cst_8 {dimension_numbers = #tpu.dot_dimension_numbers<[1], [1], [0], [0], [0, 0, 1, 0], [], []>, precision = #tpu.contract_precision<fp32>} : vector<8x8xf32>, vector<8x8xf32>, vector<8x8xf32> -> vector<8x8xf32>
    %12 = arith.addf %11, %7 : vector<8x8xf32>
    %cst_9 = arith.constant dense<0xFF800000> : vector<8xf32>
    %13 = vector.multi_reduction <maximumf>, %12, %cst_9 [1] : vector<8x8xf32> to vector<8xf32>
    %14 = vector.shape_cast %13 : vector<8xf32> to vector<8x1xf32>
    %15 = vector.broadcast %14 : vector<8x1xf32> to vector<8x8xf32>
    %16 = arith.subf %12, %15 : vector<8x8xf32>
    %17 = math.exp %16 : vector<8x8xf32>
    %cst_10 = arith.constant dense<0.000000e+00> : vector<8xf32>
    %18 = vector.multi_reduction <add>, %17, %cst_10 [1] : vector<8x8xf32> to vector<8xf32>
    %19 = vector.shape_cast %18 : vector<8xf32> to vector<8x1xf32>
    %20 = vector.broadcast %19 : vector<8x1xf32> to vector<8x8xf32>
    %21 = arith.divf %17, %20 : vector<8x8xf32>
    %cst_11 = arith.constant dense<0.000000e+00> : vector<8x8xf32>
    %22 = tpu.matmul %21, %10, %cst_11 {dimension_numbers = #tpu.dot_dimension_numbers<[1], [0], [0], [1], [0, 0, 1, 1], [], []>, precision = #tpu.contract_precision<fp32>} : vector<8x8xf32>, vector<8x8xf32>, vector<8x8xf32> -> vector<8x8xf32>
    %23 = vector.extract_strided_slice %6 {offsets = [0, 8], sizes = [8, 8], strides = [1, 1]} : vector<8x96xf32> to vector<8x8xf32>
    %24 = vector.extract_strided_slice %6 {offsets = [0, 40], sizes = [8, 8], strides = [1, 1]} : vector<8x96xf32> to vector<8x8xf32>
    %25 = vector.extract_strided_slice %6 {offsets = [0, 72], sizes = [8, 8], strides = [1, 1]} : vector<8x96xf32> to vector<8x8xf32>
    %cst_12 = arith.constant dense<0.000000e+00> : vector<8x8xf32>
    %26 = tpu.matmul %23, %24, %cst_12 {dimension_numbers = #tpu.dot_dimension_numbers<[1], [1], [0], [0], [0, 0, 1, 0], [], []>, precision = #tpu.contract_precision<fp32>} : vector<8x8xf32>, vector<8x8xf32>, vector<8x8xf32> -> vector<8x8xf32>
    %27 = arith.addf %26, %7 : vector<8x8xf32>
    %cst_13 = arith.constant dense<0xFF800000> : vector<8xf32>
    %28 = vector.multi_reduction <maximumf>, %27, %cst_13 [1] : vector<8x8xf32> to vector<8xf32>
    %29 = vector.shape_cast %28 : vector<8xf32> to vector<8x1xf32>
    %30 = vector.broadcast %29 : vector<8x1xf32> to vector<8x8xf32>
    %31 = arith.subf %27, %30 : vector<8x8xf32>
    %32 = math.exp %31 : vector<8x8xf32>
    %cst_14 = arith.constant dense<0.000000e+00> : vector<8xf32>
    %33 = vector.multi_reduction <add>, %32, %cst_14 [1] : vector<8x8xf32> to vector<8xf32>
    %34 = vector.shape_cast %33 : vector<8xf32> to vector<8x1xf32>
    %35 = vector.broadcast %34 : vector<8x1xf32> to vector<8x8xf32>
    %36 = arith.divf %32, %35 : vector<8x8xf32>
    %cst_15 = arith.constant dense<0.000000e+00> : vector<8x8xf32>
    %37 = tpu.matmul %36, %25, %cst_15 {dimension_numbers = #tpu.dot_dimension_numbers<[1], [0], [0], [1], [0, 0, 1, 1], [], []>, precision = #tpu.contract_precision<fp32>} : vector<8x8xf32>, vector<8x8xf32>, vector<8x8xf32> -> vector<8x8xf32>
    %38 = vector.extract_strided_slice %6 {offsets = [0, 16], sizes = [8, 8], strides = [1, 1]} : vector<8x96xf32> to vector<8x8xf32>
    %39 = vector.extract_strided_slice %6 {offsets = [0, 48], sizes = [8, 8], strides = [1, 1]} : vector<8x96xf32> to vector<8x8xf32>
    %40 = vector.extract_strided_slice %6 {offsets = [0, 80], sizes = [8, 8], strides = [1, 1]} : vector<8x96xf32> to vector<8x8xf32>
    %cst_16 = arith.constant dense<0.000000e+00> : vector<8x8xf32>
    %41 = tpu.matmul %38, %39, %cst_16 {dimension_numbers = #tpu.dot_dimension_numbers<[1], [1], [0], [0], [0, 0, 1, 0], [], []>, precision = #tpu.contract_precision<fp32>} : vector<8x8xf32>, vector<8x8xf32>, vector<8x8xf32> -> vector<8x8xf32>
    %42 = arith.addf %41, %7 : vector<8x8xf32>
    %cst_17 = arith.constant dense<0xFF800000> : vector<8xf32>
    %43 = vector.multi_reduction <maximumf>, %42, %cst_17 [1] : vector<8x8xf32> to vector<8xf32>
    %44 = vector.shape_cast %43 : vector<8xf32> to vector<8x1xf32>
    %45 = vector.broadcast %44 : vector<8x1xf32> to vector<8x8xf32>
    %46 = arith.subf %42, %45 : vector<8x8xf32>
    %47 = math.exp %46 : vector<8x8xf32>
    %cst_18 = arith.constant dense<0.000000e+00> : vector<8xf32>
    %48 = vector.multi_reduction <add>, %47, %cst_18 [1] : vector<8x8xf32> to vector<8xf32>
    %49 = vector.shape_cast %48 : vector<8xf32> to vector<8x1xf32>
    %50 = vector.broadcast %49 : vector<8x1xf32> to vector<8x8xf32>
    %51 = arith.divf %47, %50 : vector<8x8xf32>
    %cst_19 = arith.constant dense<0.000000e+00> : vector<8x8xf32>
    %52 = tpu.matmul %51, %40, %cst_19 {dimension_numbers = #tpu.dot_dimension_numbers<[1], [0], [0], [1], [0, 0, 1, 1], [], []>, precision = #tpu.contract_precision<fp32>} : vector<8x8xf32>, vector<8x8xf32>, vector<8x8xf32> -> vector<8x8xf32>
    %53 = vector.extract_strided_slice %6 {offsets = [0, 24], sizes = [8, 8], strides = [1, 1]} : vector<8x96xf32> to vector<8x8xf32>
    %54 = vector.extract_strided_slice %6 {offsets = [0, 56], sizes = [8, 8], strides = [1, 1]} : vector<8x96xf32> to vector<8x8xf32>
    %55 = vector.extract_strided_slice %6 {offsets = [0, 88], sizes = [8, 8], strides = [1, 1]} : vector<8x96xf32> to vector<8x8xf32>
    %cst_20 = arith.constant dense<0.000000e+00> : vector<8x8xf32>
    %56 = tpu.matmul %53, %54, %cst_20 {dimension_numbers = #tpu.dot_dimension_numbers<[1], [1], [0], [0], [0, 0, 1, 0], [], []>, precision = #tpu.contract_precision<fp32>} : vector<8x8xf32>, vector<8x8xf32>, vector<8x8xf32> -> vector<8x8xf32>
    %57 = arith.addf %56, %7 : vector<8x8xf32>
    %cst_21 = arith.constant dense<0xFF800000> : vector<8xf32>
    %58 = vector.multi_reduction <maximumf>, %57, %cst_21 [1] : vector<8x8xf32> to vector<8xf32>
    %59 = vector.shape_cast %58 : vector<8xf32> to vector<8x1xf32>
    %60 = vector.broadcast %59 : vector<8x1xf32> to vector<8x8xf32>
    %61 = arith.subf %57, %60 : vector<8x8xf32>
    %62 = math.exp %61 : vector<8x8xf32>
    %cst_22 = arith.constant dense<0.000000e+00> : vector<8xf32>
    %63 = vector.multi_reduction <add>, %62, %cst_22 [1] : vector<8x8xf32> to vector<8xf32>
    %64 = vector.shape_cast %63 : vector<8xf32> to vector<8x1xf32>
    %65 = vector.broadcast %64 : vector<8x1xf32> to vector<8x8xf32>
    %66 = arith.divf %62, %65 : vector<8x8xf32>
    %cst_23 = arith.constant dense<0.000000e+00> : vector<8x8xf32>
    %67 = tpu.matmul %66, %55, %cst_23 {dimension_numbers = #tpu.dot_dimension_numbers<[1], [0], [0], [1], [0, 0, 1, 1], [], []>, precision = #tpu.contract_precision<fp32>} : vector<8x8xf32>, vector<8x8xf32>, vector<8x8xf32> -> vector<8x8xf32>
    %68 = tpu.concatenate %22, %37, %52, %67 in 1 : vector<8x8xf32>, vector<8x8xf32>, vector<8x8xf32>, vector<8x8xf32> -> vector<8x32xf32>
    %c0_24 = arith.constant 0 : index
    %c0_25 = arith.constant 0 : index
    %69 = vector.load %arg4[%c0_24, %c0_25] : memref<32x32xf32, #tpu.memory_space<vmem>>, vector<32x32xf32>
    %cst_26 = arith.constant dense<0.000000e+00> : vector<8x32xf32>
    %70 = tpu.matmul %68, %69, %cst_26 {dimension_numbers = #tpu.dot_dimension_numbers<[1], [0], [0], [1], [0, 0, 1, 1], [], []>, precision = #tpu.contract_precision<fp32>} : vector<8x32xf32>, vector<32x32xf32>, vector<8x32xf32> -> vector<8x32xf32>
    %c0_27 = arith.constant 0 : index
    %c0_28 = arith.constant 0 : index
    %71 = vector.load %arg5[%c0_27, %c0_28] : memref<1x32xf32, #tpu.memory_space<vmem>>, vector<1x32xf32>
    %72 = vector.broadcast %71 : vector<1x32xf32> to vector<8x32xf32>
    %73 = arith.addf %70, %72 : vector<8x32xf32>
    %c0_29 = arith.constant 0 : index
    %c0_30 = arith.constant 0 : index
    %c0_31 = arith.constant 0 : index
    %74 = vector.load %arg7[%c0_29, %c0_30, %c0_31] : memref<1x8x32xf32, #tpu.memory_space<vmem>>, vector<1x8x32xf32>
    %75 = vector.shape_cast %74 : vector<1x8x32xf32> to vector<8x32xf32>
    %76 = vector.shape_cast %73 : vector<8x32xf32> to vector<1x8x32xf32>
    tpu.vector_store %arg7[%c0_29, %c0_30, %c0_31], %76 {strides = array<i32>} : memref<1x8x32xf32, #tpu.memory_space<vmem>>, vector<1x8x32xf32>,
    return
  }
  func.func @transform_0(%arg0: i32) -> (i32, i32, i32) {
    %c0_i32 = arith.constant 0 : i32
    %c0_i32_0 = arith.constant 0 : i32
    %c0_i32_1 = arith.constant 0 : i32
    return %arg0, %c0_i32, %c0_i32_0 : i32, i32, i32
  }
  func.func @transform_1(%arg0: i32) -> (i32, i32) {
    %c0_i32 = arith.constant 0 : i32
    %c0_i32_0 = arith.constant 0 : i32
    %c0_i32_1 = arith.constant 0 : i32
    return %c0_i32, %c0_i32_0 : i32, i32
  }
  func.func @transform_2(%arg0: i32) -> (i32, i32) {
    %c0_i32 = arith.constant 0 : i32
    %c0_i32_0 = arith.constant 0 : i32
    %c0_i32_1 = arith.constant 0 : i32
    return %c0_i32, %c0_i32_0 : i32, i32
  }
  func.func @transform_3(%arg0: i32) -> (i32, i32) {
    %c0_i32 = arith.constant 0 : i32
    %c0_i32_0 = arith.constant 0 : i32
    %c0_i32_1 = arith.constant 0 : i32
    return %c0_i32, %c0_i32_0 : i32, i32
  }
  func.func @transform_4(%arg0: i32) -> (i32, i32) {
    %c0_i32 = arith.constant 0 : i32
    %c0_i32_0 = arith.constant 0 : i32
    %c0_i32_1 = arith.constant 0 : i32
    return %c0_i32, %c0_i32_0 : i32, i32
  }
  func.func @transform_5(%arg0: i32) -> (i32, i32) {
    %c0_i32 = arith.constant 0 : i32
    %c0_i32_0 = arith.constant 0 : i32
    %c0_i32_1 = arith.constant 0 : i32
    return %c0_i32, %c0_i32_0 : i32, i32
  }
  func.func @transform_6(%arg0: i32) -> (i32, i32, i32) {
    %c0_i32 = arith.constant 0 : i32
    %c0_i32_0 = arith.constant 0 : i32
    %c0_i32_1 = arith.constant 0 : i32
    return %arg0, %c0_i32, %c0_i32_0 : i32, i32, i32
  }
}

</mosaic_0001>

<llo_original>
// kernel: tpu_custom_call.1
$region0: #{tpu_custom_call.1}
  #allocation0 [shape = 'u32[]', space=smem, size = 0x4, offset = 0x4, fixed_abs, tag = 'smem constant byte address 0x4 - core index']
  #allocation1 [shape = 'u32[72,128]{1,0:T(1,128)}', space=vmem, size = 0x9000, scoped, tag = 'internal scratch']
  %s0 = inlined_call_operand.hbm [shape: f32[2,8,32], index: 0, kind: input, shape index: {}]
  %s1 = inlined_call_operand.hbm [shape: f32[32,96], index: 1, kind: input, shape index: {}]
  %s2 = inlined_call_operand.vmem [shape: f32[1,96], index: 2, kind: input, shape index: {}]
  %s3 = inlined_call_operand.hbm [shape: f32[32,32], index: 3, kind: input, shape index: {}]
  %s4 = inlined_call_operand.vmem [shape: f32[1,32], index: 4, kind: input, shape index: {}]
  %s5 = inlined_call_operand.hbm [shape: f32[8,8], index: 5, kind: input, shape index: {}]
  %s6 = inlined_call_operand.hbm [shape: f32[2,8,32], index: 6, kind: output, shape index: {}]
  %s7 = sld [smem:[#allocation0]]
  $region73: #{tpu_custom_call.1} parent=0
    _
  %s9 = ssub.s32 1, %s7
  %s10 = scalar_select 0, %s9, %s7
  $region1: #{tpu_custom_call.1} parent=0
    #allocation2 [shape = 'u8[8192]{0}', space=vmem, size = 0x2000, scoped, tag = 'input window, operand 0']
    #allocation3 [shape = 's32[2]{0}', space=sflag, size = 0x8, scoped, tag = 'scoped memory for tpu_custom_call.1']
    #allocation4 [shape = 's32[2]{0}', space=sflag, size = 0x8, scoped, tag = 'scoped memory for tpu_custom_call.1']
    #allocation5 [shape = 'u8[16384]{0}', space=vmem, size = 0x4000, scoped, tag = 'input window, operand 1, single buffered']
    #allocation6 [shape = 's32[1]{0}', space=sflag, size = 0x4, scoped, tag = 'scoped memory for tpu_custom_call.1']
    #allocation7 [shape = 'u8[16384]{0}', space=vmem, size = 0x4000, scoped, tag = 'input window, operand 3, single buffered']
    #allocation8 [shape = 'u8[4096]{0}', space=vmem, size = 0x1000, scoped, tag = 'input window, operand 5, single buffered']
    #allocation9 [shape = 's32[1]{0}', space=sflag, size = 0x4, scoped, tag = 'scoped memory for tpu_custom_call.1']
    #allocation10 [shape = 'u8[8192]{0}', space=vmem, size = 0x2000, scoped, tag = 'output window, operand 0']
    %11 = vsyncpa [#allocation3], 0
    %s12 = scalar_lea.sflag [#allocation3], 1
    %13 = vsyncpa %s12, 0
    %14 = vsyncpa [#allocation6], 0
    %15 = vsyncpa [#allocation9], 0
    %16 = vsyncpa [#allocation4], 0
    %s17 = scalar_lea.sflag [#allocation4], 1
    %18 = vsyncpa %s17, 0
    loop: start=0, step=1, limit=4
    $region2: #{tpu_custom_call.1} parent=1 // loop_pre_header
      _
    $region3: #{tpu_custom_call.1} parent=1 // loop_header
      %s20 = sphi 0, %s24
      %p21 = scmp.ge.s32.totalorder %s20, 4
      %s30 = sphi 0, %s32
      %s33 = sphi 0, %s30
      %s34 = sphi 0, %s33
      %s50 = sphi 0, %s34
      %s54 = sphi 0, %s54
      %s56 = sphi 0, %s54
      %s57 = sphi 0, %s56
      %s71 = sphi 0, %s57
      %s75 = sphi 0, %s75
      %s77 = sphi 0, %s75
      %s78 = sphi 0, %s77
      %s92 = sphi 0, %s78
      %s96 = sphi 0, %s96
      %s98 = sphi 0, %s96
      %s99 = sphi 0, %s98
      %s113 = sphi 0, %s99
      %s117 = sphi 0, %s117
      %s119 = sphi 0, %s117
      %s120 = sphi 0, %s119
      %s134 = sphi 0, %s120
      %s138 = sphi 0, %s138
      %s140 = sphi 0, %s138
      %s141 = sphi 0, %s140
      %s155 = sphi 0, %s141
      %s161 = sphi 0, %s163
      %s164 = sphi 0, %s161
      %s165 = sphi 0, %s164
      %s181 = sphi 0, %s165
    $region4: #{tpu_custom_call.1} parent=1 // loop_header_branch
      %23 = sbr.rel (%p21) target = $region8
    $region5: #{tpu_custom_call.1} parent=1 // loop_body
      %s25 = ssub.s32 %s20, 1
      %s26 = ssub.s32 %s20, 2
      %s27 = sadd.s32 %s20, 1
      %s28 = ssub.s32 %s20, %s27
      %p29 = scmp.eq.s32.totalorder %s28, 0
      %s31 = sadd.s32 %s30, 1
      %s32 = scalar_select %p29, %s30, %s31
      %p35 = pneg %p29
      %p36 = scmp.eq.s32.totalorder %s20, 1
      %p37 = por %p35, %p36
      %p38 = scmp.ne.s32.totalorder %s30, %s33
      %p39 = scmp.eq.s32.totalorder %s20, 0
      %p40 = por %p38, %p39
      %p41 = scmp.ne.s32.totalorder %s30, %s33
      %p42 = scmp.eq.s32.totalorder %s25, 1
      %p43 = por %p41, %p42
      %p44 = scmp.ne.s32.totalorder %s33, %s34
      %p45 = scmp.eq.s32.totalorder %s25, 0
      %p46 = por %p44, %p45
      %p47 = scmp.ne.s32.totalorder %s33, %s34
      %p48 = scmp.eq.s32.totalorder %s26, 1
      %p49 = por %p47, %p48
      %p51 = scmp.ne.s32.totalorder %s34, %s50
      %p52 = scmp.eq.s32.totalorder %s26, 0
      %p53 = por %p51, %p52
      %s55 = sadd.s32 %s54, 1
      %p58 = scmp.eq.s32.totalorder %s20, 1
      %p59 = scmp.ne.s32.totalorder %s54, %s56
      %p60 = scmp.eq.s32.totalorder %s20, 0
      %p61 = por %p59, %p60
      %p62 = scmp.ne.s32.totalorder %s54, %s56
      %p63 = scmp.eq.s32.totalorder %s25, 1
      %p64 = por %p62, %p63
      %p65 = scmp.ne.s32.totalorder %s56, %s57
      %p66 = scmp.eq.s32.totalorder %s25, 0
      %p67 = por %p65, %p66
      %p68 = scmp.ne.s32.totalorder %s56, %s57
      %p69 = scmp.eq.s32.totalorder %s26, 1
      %p70 = por %p68, %p69
      %p72 = scmp.ne.s32.totalorder %s57, %s71
      %p73 = scmp.eq.s32.totalorder %s26, 0
      %p74 = por %p72, %p73
      %s76 = sadd.s32 %s75, 1
      %p79 = scmp.eq.s32.totalorder %s20, 1
      %p80 = scmp.ne.s32.totalorder %s75, %s77
      %p81 = scmp.eq.s32.totalorder %s20, 0
      %p82 = por %p80, %p81
      %p83 = scmp.ne.s32.totalorder %s75, %s77
      %p84 = scmp.eq.s32.totalorder %s25, 1
      %p85 = por %p83, %p84
      %p86 = scmp.ne.s32.totalorder %s77, %s78
      %p87 = scmp.eq.s32.totalorder %s25, 0
      %p88 = por %p86, %p87
      %p89 = scmp.ne.s32.totalorder %s77, %s78
      %p90 = scmp.eq.s32.totalorder %s26, 1
      %p91 = por %p89, %p90
      %p93 = scmp.ne.s32.totalorder %s78, %s92
      %p94 = scmp.eq.s32.totalorder %s26, 0
      %p95 = por %p93, %p94
      %s97 = sadd.s32 %s96, 1
      %p100 = scmp.eq.s32.totalorder %s20, 1
      %p101 = scmp.ne.s32.totalorder %s96, %s98
      %p102 = scmp.eq.s32.totalorder %s20, 0
      %p103 = por %p101, %p102
      %p104 = scmp.ne.s32.totalorder %s96, %s98
      %p105 = scmp.eq.s32.totalorder %s25, 1
      %p106 = por %p104, %p105
      %p107 = scmp.ne.s32.totalorder %s98, %s99
      %p108 = scmp.eq.s32.totalorder %s25, 0
      %p109 = por %p107, %p108
      %p110 = scmp.ne.s32.totalorder %s98, %s99
      %p111 = scmp.eq.s32.totalorder %s26, 1
      %p112 = por %p110, %p111
      %p114 = scmp.ne.s32.totalorder %s99, %s113
      %p115 = scmp.eq.s32.totalorder %s26, 0
      %p116 = por %p114, %p115
      %s118 = sadd.s32 %s117, 1
      %p121 = scmp.eq.s32.totalorder %s20, 1
      %p122 = scmp.ne.s32.totalorder %s117, %s119
      %p123 = scmp.eq.s32.totalorder %s20, 0
      %p124 = por %p122, %p123
      %p125 = scmp.ne.s32.totalorder %s117, %s119
      %p126 = scmp.eq.s32.totalorder %s25, 1
      %p127 = por %p125, %p126
      %p128 = scmp.ne.s32.totalorder %s119, %s120
      %p129 = scmp.eq.s32.totalorder %s25, 0
      %p130 = por %p128, %p129
      %p131 = scmp.ne.s32.totalorder %s119, %s120
      %p132 = scmp.eq.s32.totalorder %s26, 1
      %p133 = por %p131, %p132
      %p135 = scmp.ne.s32.totalorder %s120, %s134
      %p136 = scmp.eq.s32.totalorder %s26, 0
      %p137 = por %p135, %p136
      %s139 = sadd.s32 %s138, 1
      %p142 = scmp.eq.s32.totalorder %s20, 1
      %p143 = scmp.ne.s32.totalorder %s138, %s140
      %p144 = scmp.eq.s32.totalorder %s20, 0
      %p145 = por %p143, %p144
      %p146 = scmp.ne.s32.totalorder %s138, %s140
      %p147 = scmp.eq.s32.totalorder %s25, 1
      %p148 = por %p146, %p147
      %p149 = scmp.ne.s32.totalorder %s140, %s141
      %p150 = scmp.eq.s32.totalorder %s25, 0
      %p151 = por %p149, %p150
      %p152 = scmp.ne.s32.totalorder %s140, %s141
      %p153 = scmp.eq.s32.totalorder %s26, 1
      %p154 = por %p152, %p153
      %p156 = scmp.ne.s32.totalorder %s141, %s155
      %p157 = scmp.eq.s32.totalorder %s26, 0
      %p158 = por %p156, %p157
      %s159 = ssub.s32 %s20, %s27
      %p160 = scmp.eq.s32.totalorder %s159, 0
      %s162 = sadd.s32 %s161, 1
      %s163 = scalar_select %p160, %s161, %s162
      %p166 = pneg %p160
      %p167 = scmp.eq.s32.totalorder %s20, 1
      %p168 = por %p166, %p167
      %p169 = scmp.ne.s32.totalorder %s161, %s164
      %p170 = scmp.eq.s32.totalorder %s20, 0
      %p171 = por %p169, %p170
      %p172 = scmp.ne.s32.totalorder %s161, %s164
      %p173 = scmp.eq.s32.totalorder %s25, 1
      %p174 = por %p172, %p173
      %p175 = scmp.ne.s32.totalorder %s164, %s165
      %p176 = scmp.eq.s32.totalorder %s25, 0
      %p177 = por %p175, %p176
      %p178 = scmp.ne.s32.totalorder %s164, %s165
      %p179 = scmp.eq.s32.totalorder %s26, 1
      %p180 = por %p178, %p179
      %p182 = scmp.ne.s32.totalorder %s165, %s181
      %p183 = scmp.eq.s32.totalorder %s26, 0
      %p184 = por %p182, %p183
      %p185 = scmp.le.s32.totalorder 1, %s20
      %p186 = scmp.lt.s32.totalorder %s20, 3
      %p187 = pnand %p185, %p186
      %p188 = pneg %p187
      // Predicated region
      $region9: #{tpu_custom_call.1} parent=5 // pred_check
        _
      $region10: #{tpu_custom_call.1} parent=5 // pred_check_branch
        %190 = sbr.rel (%p187) target = $region12
      $region11: #{tpu_custom_call.1} parent=5 // pred_region
        %s191 = ssub.s32 %s20, 1
        // Predicated region
        $region13: #{tpu_custom_call.1} parent=11 // pred_check
          %p192 = pneg %p67
        $region14: #{tpu_custom_call.1} parent=11 // pred_check_branch
          %194 = sbr.rel (%p192) target = $region16
        $region15: #{tpu_custom_call.1} parent=11 // pred_region
          %196 = vsyncadd [#allocation6], 0
          %s197 = sshll.u32 %s1, 4
          %s198 = int_to_ptr.hbm [resolvable:$true] %s197
          %s199 = sshll.u32 [#allocation5], 4
          %s200 = int_to_ptr.vmem [resolvable:$true] %s199
          %205 = dma.hbm_to_vmem [thread:$0]  %s198, 512, %s200, [#allocation6], 128, 128, 8
        $region16: #{tpu_custom_call.1} parent=11 // pred_fallthru
          _
        // Predicated region
        $region17: #{tpu_custom_call.1} parent=11 // pred_check
          %p206 = pneg %p88
        $region18: #{tpu_custom_call.1} parent=11 // pred_check_branch
          %208 = sbr.rel (%p206) target = $region20
        $region19: #{tpu_custom_call.1} parent=11 // pred_region
          _
        $region20: #{tpu_custom_call.1} parent=11 // pred_fallthru
          _
        // Predicated region
        $region21: #{tpu_custom_call.1} parent=11 // pred_check
          %p209 = pneg %p109
        $region22: #{tpu_custom_call.1} parent=11 // pred_check_branch
          %211 = sbr.rel (%p209) target = $region24
        $region23: #{tpu_custom_call.1} parent=11 // pred_region
          %213 = vsyncadd [#allocation6], 0
          %s214 = sshll.u32 %s3, 4
          %s215 = int_to_ptr.hbm [resolvable:$true] %s214
          %s216 = sshll.u32 [#allocation7], 4
          %s217 = int_to_ptr.vmem [resolvable:$true] %s216
          %222 = dma.hbm_to_vmem [thread:$0]  %s215, 512, %s217, [#allocation6], 128, 128, 8
        $region24: #{tpu_custom_call.1} parent=11 // pred_fallthru
          _
        // Predicated region
        $region25: #{tpu_custom_call.1} parent=11 // pred_check
          %p223 = pneg %p130
        $region26: #{tpu_custom_call.1} parent=11 // pred_check_branch
          %225 = sbr.rel (%p223) target = $region28
        $region27: #{tpu_custom_call.1} parent=11 // pred_region
          _
        $region28: #{tpu_custom_call.1} parent=11 // pred_fallthru
          _
        // Predicated region
        $region29: #{tpu_custom_call.1} parent=11 // pred_check
          %p226 = pneg %p151
        $region30: #{tpu_custom_call.1} parent=11 // pred_check_branch
          %228 = sbr.rel (%p226) target = $region32
        $region31: #{tpu_custom_call.1} parent=11 // pred_region
          %230 = vsyncadd [#allocation9], 0
          %s232 = sshll.u32 %s5, 4
          %s233 = int_to_ptr.hbm [resolvable:$true] %s232
          %s234 = sshll.u32 [#allocation8], 4
          %s235 = int_to_ptr.vmem [resolvable:$true] %s234
          %237 = dma.hbm_to_vmem [thread:$0]  %s233, 128, %s235, [#allocation9]
        $region32: #{tpu_custom_call.1} parent=11 // pred_fallthru
          _
      $region12: #{tpu_custom_call.1} parent=5 // pred_fallthru
        _
      %p238 = scmp.lt.s32.totalorder %s20, 2
      // Predicated region
      $region33: #{tpu_custom_call.1} parent=5 // pred_check
        %p239 = pneg %p238
      $region34: #{tpu_custom_call.1} parent=5 // pred_check_branch
        %241 = sbr.rel (%p239) target = $region36
      $region35: #{tpu_custom_call.1} parent=5 // pred_region
        // Predicated region
        $region37: #{tpu_custom_call.1} parent=35 // pred_check
          %p242 = pneg %p40
        $region38: #{tpu_custom_call.1} parent=35 // pred_check_branch
          %244 = sbr.rel (%p242) target = $region40
        $region39: #{tpu_custom_call.1} parent=35 // pred_region
          %s245 = sand.u32 %s30, 1
          %s246 = scalar_lea.sflag [#allocation3], %s245
          %s247 = sand.u32 %s30, 1
          %s248 = smul.addr %s247, 8
          %s249 = scalar_lea.vmem [#allocation2], %s248
          %251 = vsyncadd %s246, 0
          %s252 = smul.addr %s20, 8
          %s253 = scalar_lea.hbm %s0, %s252
          %s255 = sshll.u32 %s253, 4
          %s256 = int_to_ptr.hbm [resolvable:$true] %s255
          %s257 = sshll.u32 %s249, 4
          %s258 = int_to_ptr.vmem [resolvable:$true] %s257
          %260 = dma.hbm_to_vmem [thread:$0]  %s256, 128, %s258, %s246
        $region40: #{tpu_custom_call.1} parent=35 // pred_fallthru
          _
      $region36: #{tpu_custom_call.1} parent=5 // pred_fallthru
        _
      %p261 = scmp.le.s32.totalorder 1, %s20
      %p262 = scmp.lt.s32.totalorder %s20, 3
      %p263 = pnand %p261, %p262
      %p264 = pneg %p263
      // Predicated region
      $region41: #{tpu_custom_call.1} parent=5 // pred_check
        _
      $region42: #{tpu_custom_call.1} parent=5 // pred_check_branch
        %266 = sbr.rel (%p263) target = $region44
      $region43: #{tpu_custom_call.1} parent=5 // pred_region
        %s267 = ssub.s32 %s20, 1
        %s268 = sand.u32 %s33, 1
        %s269 = scalar_lea.sflag [#allocation3], %s268
        %s270 = sand.u32 %s33, 1
        %s271 = smul.addr %s270, 8
        %s272 = scalar_lea.vmem [#allocation2], %s271
        // Predicated region
        $region45: #{tpu_custom_call.1} parent=43 // pred_check
          %p273 = pneg %p46
        $region46: #{tpu_custom_call.1} parent=43 // pred_check_branch
          %275 = sbr.rel (%p273) target = $region48
        $region47: #{tpu_custom_call.1} parent=43 // pred_region
          %277 = dma.done %s269, 128
        $region48: #{tpu_custom_call.1} parent=43 // pred_fallthru
          _
        // Predicated region
        $region49: #{tpu_custom_call.1} parent=43 // pred_check
          %p278 = pneg %p67
        $region50: #{tpu_custom_call.1} parent=43 // pred_check_branch
          %280 = sbr.rel (%p278) target = $region52
        $region51: #{tpu_custom_call.1} parent=43 // pred_region
          %282 = dma.done [#allocation6], 512
        $region52: #{tpu_custom_call.1} parent=43 // pred_fallthru
          _
        // Predicated region
        $region53: #{tpu_custom_call.1} parent=43 // pred_check
          %p283 = pneg %p109
        $region54: #{tpu_custom_call.1} parent=43 // pred_check_branch
          %285 = sbr.rel (%p283) target = $region56
        $region55: #{tpu_custom_call.1} parent=43 // pred_region
          %287 = dma.done [#allocation6], 512
        $region56: #{tpu_custom_call.1} parent=43 // pred_fallthru
          _
        // Predicated region
        $region57: #{tpu_custom_call.1} parent=43 // pred_check
          %p288 = pneg %p151
        $region58: #{tpu_custom_call.1} parent=43 // pred_check_branch
          %290 = sbr.rel (%p288) target = $region60
        $region59: #{tpu_custom_call.1} parent=43 // pred_region
          %292 = dma.done [#allocation9], 128
        $region60: #{tpu_custom_call.1} parent=43 // pred_fallthru
          _
        %s293 = sand.u32 %s33, 1
        %s294 = scalar_lea.sflag [#allocation3], %s293
        %s295 = sand.u32 %s33, 1
        %s296 = smul.addr %s295, 8
        %s297 = scalar_lea.vmem [#allocation2], %s296
        %p298 = pneg %p46
        %p299 = pneg %p43
        %p300 = pneg %p67
        %p301 = pneg %p64
        %p302 = pneg %p88
        %p303 = pneg %p85
        %p304 = pneg %p109
        %p305 = pneg %p106
        %p306 = pneg %p130
        %p307 = pneg %p127
        %p308 = pneg %p151
        %p309 = pneg %p148
        %p310 = pneg %p177
        %p311 = pneg %p174
        %s312 = sand.u32 %s164, 1
        %s313 = scalar_lea.sflag [#allocation4], %s312
        %s314 = sand.u32 %s164, 1
        %s315 = smul.addr %s314, 8
        %s316 = scalar_lea.vmem [#allocation10], %s315
        %v317 = vld [vmem:[%s272] sm:$0xff]
        %v318 = vld [vmem:[#allocation5] sm:$0xff]
        %v319 = vld [vmem:[#allocation5 + $0x8] sm:$0xff]
        %v320 = vld [vmem:[#allocation5 + $0x10] sm:$0xff]
        %v321 = vld [vmem:[#allocation5 + $0x18] sm:$0xff]
        %v322 = vld [vmem:[%s2] sm:$0x1]
        %v324 = vperm.slane %v322, 0
        %vm326 = vcmask 261120
        %v328 = vsel %vm326, %v317, 0
        %330 = vmatpush.msra.mxu0 0.0
        %331 = vmatpush.msra.mxu0 0.0
        %332 = vmatpush.msra.mxu0 0.0
        %333 = vmatpush.msra.mxu0 0.0
        %334 = vmatpush.msra.mxu0 0.0
        %335 = vmatpush.msra.mxu0 0.0
        %336 = vmatpush.msra.mxu0 0.0
        %337 = vmatpush.msra.mxu0 0.0
        %338 = vmatpush.msra.mxu0 0.0
        %339 = vmatpush.msra.mxu0 0.0
        %340 = vmatpush.msra.mxu0 0.0
        %341 = vmatpush.msra.mxu0 0.0
        %v342 = vand.u32 %v321, 4294901760
        %343 = vmatpush.msra.mxu0 %v342
        %v344 = vand.u32 %v320, 4294901760
        %345 = vmatpush.msra.mxu0 %v344
        %v346 = vand.u32 %v319, 4294901760
        %347 = vmatpush.msra.mxu0 %v346
        %v348 = vand.u32 %v318, 4294901760
        %349 = vmatpush.msra.mxu0 %v348
        %v350 = vand.u32 %v328, 4294901760
        %v351 = vsub.f32 %v328, %v350
        %v352 = vand.u32 %v351, 4294901760
        %v353 = vsub.f32 %v351, %v352
        %v354 = vand.u32 %v353, 4294901760
        %355 = vmatmul.f32.gmra.mxu0 %v354
        %v356 = vpop.f32.mrf.mxu0
        %v357 = vadd.f32 %v324, %v356
        %358 = vdwg.mxu0
        %359 = vmatpush.msra.mxu0 0.0
        %360 = vmatpush.msra.mxu0 0.0
        %361 = vmatpush.msra.mxu0 0.0
        %362 = vmatpush.msra.mxu0 0.0
        %363 = vmatpush.msra.mxu0 0.0
        %364 = vmatpush.msra.mxu0 0.0
        %365 = vmatpush.msra.mxu0 0.0
        %366 = vmatpush.msra.mxu0 0.0
        %367 = vmatpush.msra.mxu0 0.0
        %368 = vmatpush.msra.mxu0 0.0
        %369 = vmatpush.msra.mxu0 0.0
        %370 = vmatpush.msra.mxu0 0.0
        %v371 = vand.u32 %v321, 4294901760
        %v372 = vsub.f32 %v321, %v371
        %v373 = vand.u32 %v372, 4294901760
        %v374 = vsub.f32 %v372, %v373
        %v375 = vand.u32 %v374, 4294901760
        %376 = vmatpush.msra.mxu0 %v375
        %v377 = vand.u32 %v320, 4294901760
        %v378 = vsub.f32 %v320, %v377
        %v379 = vand.u32 %v378, 4294901760
        %v380 = vsub.f32 %v378, %v379
        %v381 = vand.u32 %v380, 4294901760
        %382 = vmatpush.msra.mxu0 %v381
        %v383 = vand.u32 %v319, 4294901760
        %v384 = vsub.f32 %v319, %v383
        %v385 = vand.u32 %v384, 4294901760
        %v386 = vsub.f32 %v384, %v385
        %v387 = vand.u32 %v386, 4294901760
        %388 = vmatpush.msra.mxu0 %v387
        %v389 = vand.u32 %v318, 4294901760
        %v390 = vsub.f32 %v318, %v389
        %v391 = vand.u32 %v390, 4294901760
        %v392 = vsub.f32 %v390, %v391
        %v393 = vand.u32 %v392, 4294901760
        %394 = vmatpush.msra.mxu0 %v393
        %v395 = vand.u32 %v328, 4294901760
        %396 = vmatmul.f32.gmra.mxu0 %v395
        %v397 = vpop.f32.mrf.mxu0
        %v398 = vadd.f32 %v357, %v397
        %399 = vdwg.mxu0
        %400 = vmatpush.msra.mxu0 0.0
        %401 = vmatpush.msra.mxu0 0.0
        %402 = vmatpush.msra.mxu0 0.0
        %403 = vmatpush.msra.mxu0 0.0
        %404 = vmatpush.msra.mxu0 0.0
        %405 = vmatpush.msra.mxu0 0.0
        %406 = vmatpush.msra.mxu0 0.0
        %407 = vmatpush.msra.mxu0 0.0
        %408 = vmatpush.msra.mxu0 0.0
        %409 = vmatpush.msra.mxu0 0.0
        %410 = vmatpush.msra.mxu0 0.0
        %411 = vmatpush.msra.mxu0 0.0
        %v412 = vand.u32 %v321, 4294901760
        %v413 = vsub.f32 %v321, %v412
        %414 = vmatpush.msra.mxu0 %v413
        %v415 = vand.u32 %v320, 4294901760
        %v416 = vsub.f32 %v320, %v415
        %417 = vmatpush.msra.mxu0 %v416
        %v418 = vand.u32 %v319, 4294901760
        %v419 = vsub.f32 %v319, %v418
        %420 = vmatpush.msra.mxu0 %v419
        %v421 = vand.u32 %v318, 4294901760
        %v422 = vsub.f32 %v318, %v421
        %423 = vmatpush.msra.mxu0 %v422
        %v424 = vand.u32 %v328, 4294901760
        %v425 = vsub.f32 %v328, %v424
        %426 = vmatmul.f32.gmra.mxu0 %v425
        %v427 = vpop.f32.mrf.mxu0
        %v428 = vadd.f32 %v398, %v427
        %429 = vdwg.mxu0
        %430 = vmatpush.msra.mxu0 0.0
        %431 = vmatpush.msra.mxu0 0.0
        %432 = vmatpush.msra.mxu0 0.0
        %433 = vmatpush.msra.mxu0 0.0
        %434 = vmatpush.msra.mxu0 0.0
        %435 = vmatpush.msra.mxu0 0.0
        %436 = vmatpush.msra.mxu0 0.0
        %437 = vmatpush.msra.mxu0 0.0
        %438 = vmatpush.msra.mxu0 0.0
        %439 = vmatpush.msra.mxu0 0.0
        %440 = vmatpush.msra.mxu0 0.0
        %441 = vmatpush.msra.mxu0 0.0
        %v442 = vand.u32 %v321, 4294901760
        %443 = vmatpush.msra.mxu0 %v442
        %v444 = vand.u32 %v320, 4294901760
        %445 = vmatpush.msra.mxu0 %v444
        %v446 = vand.u32 %v319, 4294901760
        %447 = vmatpush.msra.mxu0 %v446
        %v448 = vand.u32 %v318, 4294901760
        %449 = vmatpush.msra.mxu0 %v448
        %v450 = vand.u32 %v328, 4294901760
        %v451 = vsub.f32 %v328, %v450
        %v452 = vand.u32 %v451, 4294901760
        %453 = vmatmul.f32.gmra.mxu0 %v452
        %v454 = vpop.f32.mrf.mxu0
        %v455 = vadd.f32 %v428, %v454
        %456 = vdwg.mxu0
        %457 = vmatpush.msra.mxu0 0.0
        %458 = vmatpush.msra.mxu0 0.0
        %459 = vmatpush.msra.mxu0 0.0
        %460 = vmatpush.msra.mxu0 0.0
        %461 = vmatpush.msra.mxu0 0.0
        %462 = vmatpush.msra.mxu0 0.0
        %463 = vmatpush.msra.mxu0 0.0
        %464 = vmatpush.msra.mxu0 0.0
        %465 = vmatpush.msra.mxu0 0.0
        %466 = vmatpush.msra.mxu0 0.0
        %467 = vmatpush.msra.mxu0 0.0
        %468 = vmatpush.msra.mxu0 0.0
        %v469 = vand.u32 %v321, 4294901760
        %v470 = vsub.f32 %v321, %v469
        %v471 = vand.u32 %v470, 4294901760
        %472 = vmatpush.msra.mxu0 %v471
        %v473 = vand.u32 %v320, 4294901760
        %v474 = vsub.f32 %v320, %v473
        %v475 = vand.u32 %v474, 4294901760
        %476 = vmatpush.msra.mxu0 %v475
        %v477 = vand.u32 %v319, 4294901760
        %v478 = vsub.f32 %v319, %v477
        %v479 = vand.u32 %v478, 4294901760
        %480 = vmatpush.msra.mxu0 %v479
        %v481 = vand.u32 %v318, 4294901760
        %v482 = vsub.f32 %v318, %v481
        %v483 = vand.u32 %v482, 4294901760
        %484 = vmatpush.msra.mxu0 %v483
        %v485 = vand.u32 %v328, 4294901760
        %486 = vmatmul.f32.gmra.mxu0 %v485
        %v487 = vpop.f32.mrf.mxu0
        %v488 = vadd.f32 %v455, %v487
        %489 = vdwg.mxu0
        %490 = vmatpush.msra.mxu0 0.0
        %491 = vmatpush.msra.mxu0 0.0
        %492 = vmatpush.msra.mxu0 0.0
        %493 = vmatpush.msra.mxu0 0.0
        %494 = vmatpush.msra.mxu0 0.0
        %495 = vmatpush.msra.mxu0 0.0
        %496 = vmatpush.msra.mxu0 0.0
        %497 = vmatpush.msra.mxu0 0.0
        %498 = vmatpush.msra.mxu0 0.0
        %499 = vmatpush.msra.mxu0 0.0
        %500 = vmatpush.msra.mxu0 0.0
        %501 = vmatpush.msra.mxu0 0.0
        %v502 = vand.u32 %v321, 4294901760
        %503 = vmatpush.msra.mxu0 %v502
        %v504 = vand.u32 %v320, 4294901760
        %505 = vmatpush.msra.mxu0 %v504
        %v506 = vand.u32 %v319, 4294901760
        %507 = vmatpush.msra.mxu0 %v506
        %v508 = vand.u32 %v318, 4294901760
        %509 = vmatpush.msra.mxu0 %v508
        %v510 = vand.u32 %v328, 4294901760
        %511 = vmatmul.f32.gmra.mxu0 %v510
        %v512 = vpop.f32.mrf.mxu0
        %v513 = vadd.f32 %v488, %v512
        %514 = vdwg.mxu0
        %v515 = vld [vmem:[#allocation8] sm:$0xff]
        %517 = vrot.lane.b32.xlu0 %v513, 96
        %v518 = vpop.permute.xlu0 %517
        %vm519 = vcmask 64512
        %v520 = vsel %vm519, %v513, 0
        %v522 = vsel %vm519, %v518, 0
        %524 = vmatpush.xpose.msra.mxu0 0.0
        %525 = vmatpush.xpose.msra.mxu0 0.0
        %526 = vmatpush.xpose.msra.mxu0 0.0
        %527 = vmatpush.xpose.msra.mxu0 0.0
        %528 = vmatpush.xpose.msra.mxu0 0.0
        %529 = vmatpush.xpose.msra.mxu0 0.0
        %530 = vmatpush.xpose.msra.mxu0 0.0
        %531 = vmatpush.xpose.msra.mxu0 0.0
        %532 = vmatpush.xpose.msra.mxu0 0.0
        %533 = vmatpush.xpose.msra.mxu0 0.0
        %534 = vmatpush.xpose.msra.mxu0 0.0
        %535 = vmatpush.xpose.msra.mxu0 0.0
        %536 = vmatpush.xpose.msra.mxu0 0.0
        %537 = vmatpush.xpose.msra.mxu0 0.0
        %538 = vmatpush.xpose.msra.mxu0 0.0
        %v539 = vand.u32 %v522, 4294901760
        %540 = vmatpush.xpose.msra.mxu0 %v539
        %v541 = vand.u32 %v520, 4294901760
        %v542 = vsub.f32 %v520, %v541
        %v543 = vand.u32 %v542, 4294901760
        %v544 = vsub.f32 %v542, %v543
        %v545 = vand.u32 %v544, 4294901760
        %546 = vmatmul.f32.gmra.mxu0 %v545
        %v547 = vpop.f32.mrf.mxu0
        %v548 = vadd.f32 %v515, %v547
        %549 = vdwg.mxu0
        %550 = vmatpush.xpose.msra.mxu0 0.0
        %551 = vmatpush.xpose.msra.mxu0 0.0
        %552 = vmatpush.xpose.msra.mxu0 0.0
        %553 = vmatpush.xpose.msra.mxu0 0.0
        %554 = vmatpush.xpose.msra.mxu0 0.0
        %555 = vmatpush.xpose.msra.mxu0 0.0
        %556 = vmatpush.xpose.msra.mxu0 0.0
        %557 = vmatpush.xpose.msra.mxu0 0.0
        %558 = vmatpush.xpose.msra.mxu0 0.0
        %559 = vmatpush.xpose.msra.mxu0 0.0
        %560 = vmatpush.xpose.msra.mxu0 0.0
        %561 = vmatpush.xpose.msra.mxu0 0.0
        %562 = vmatpush.xpose.msra.mxu0 0.0
        %563 = vmatpush.xpose.msra.mxu0 0.0
        %564 = vmatpush.xpose.msra.mxu0 0.0
        %v565 = vand.u32 %v522, 4294901760
        %v566 = vsub.f32 %v522, %v565
        %v567 = vand.u32 %v566, 4294901760
        %v568 = vsub.f32 %v566, %v567
        %v569 = vand.u32 %v568, 4294901760
        %570 = vmatpush.xpose.msra.mxu0 %v569
        %v571 = vand.u32 %v520, 4294901760
        %572 = vmatmul.f32.gmra.mxu0 %v571
        %v573 = vpop.f32.mrf.mxu0
        %v574 = vadd.f32 %v548, %v573
        %575 = vdwg.mxu0
        %576 = vmatpush.xpose.msra.mxu0 0.0
        %577 = vmatpush.xpose.msra.mxu0 0.0
        %578 = vmatpush.xpose.msra.mxu0 0.0
        %579 = vmatpush.xpose.msra.mxu0 0.0
        %580 = vmatpush.xpose.msra.mxu0 0.0
        %581 = vmatpush.xpose.msra.mxu0 0.0
        %582 = vmatpush.xpose.msra.mxu0 0.0
        %583 = vmatpush.xpose.msra.mxu0 0.0
        %584 = vmatpush.xpose.msra.mxu0 0.0
        %585 = vmatpush.xpose.msra.mxu0 0.0
        %586 = vmatpush.xpose.msra.mxu0 0.0
        %587 = vmatpush.xpose.msra.mxu0 0.0
        %588 = vmatpush.xpose.msra.mxu0 0.0
        %589 = vmatpush.xpose.msra.mxu0 0.0
        %590 = vmatpush.xpose.msra.mxu0 0.0
        %v591 = vand.u32 %v522, 4294901760
        %v592 = vsub.f32 %v522, %v591
        %593 = vmatpush.xpose.msra.mxu0 %v592
        %v594 = vand.u32 %v520, 4294901760
        %v595 = vsub.f32 %v520, %v594
        %596 = vmatmul.f32.gmra.mxu0 %v595
        %v597 = vpop.f32.mrf.mxu0
        %v598 = vadd.f32 %v574, %v597
        %599 = vdwg.mxu0
        %600 = vmatpush.xpose.msra.mxu0 0.0
        %601 = vmatpush.xpose.msra.mxu0 0.0
        %602 = vmatpush.xpose.msra.mxu0 0.0
        %603 = vmatpush.xpose.msra.mxu0 0.0
        %604 = vmatpush.xpose.msra.mxu0 0.0
        %605 = vmatpush.xpose.msra.mxu0 0.0
        %606 = vmatpush.xpose.msra.mxu0 0.0
        %607 = vmatpush.xpose.msra.mxu0 0.0
        %608 = vmatpush.xpose.msra.mxu0 0.0
        %609 = vmatpush.xpose.msra.mxu0 0.0
        %610 = vmatpush.xpose.msra.mxu0 0.0
        %611 = vmatpush.xpose.msra.mxu0 0.0
        %612 = vmatpush.xpose.msra.mxu0 0.0
        %613 = vmatpush.xpose.msra.mxu0 0.0
        %614 = vmatpush.xpose.msra.mxu0 0.0
        %v615 = vand.u32 %v522, 4294901760
        %616 = vmatpush.xpose.msra.mxu0 %v615
        %v617 = vand.u32 %v520, 4294901760
        %v618 = vsub.f32 %v520, %v617
        %v619 = vand.u32 %v618, 4294901760
        %620 = vmatmul.f32.gmra.mxu0 %v619
        %v621 = vpop.f32.mrf.mxu0
        %v622 = vadd.f32 %v598, %v621
        %623 = vdwg.mxu0
        %624 = vmatpush.xpose.msra.mxu0 0.0
        %625 = vmatpush.xpose.msra.mxu0 0.0
        %626 = vmatpush.xpose.msra.mxu0 0.0
        %627 = vmatpush.xpose.msra.mxu0 0.0
        %628 = vmatpush.xpose.msra.mxu0 0.0
        %629 = vmatpush.xpose.msra.mxu0 0.0
        %630 = vmatpush.xpose.msra.mxu0 0.0
        %631 = vmatpush.xpose.msra.mxu0 0.0
        %632 = vmatpush.xpose.msra.mxu0 0.0
        %633 = vmatpush.xpose.msra.mxu0 0.0
        %634 = vmatpush.xpose.msra.mxu0 0.0
        %635 = vmatpush.xpose.msra.mxu0 0.0
        %636 = vmatpush.xpose.msra.mxu0 0.0
        %637 = vmatpush.xpose.msra.mxu0 0.0
        %638 = vmatpush.xpose.msra.mxu0 0.0
        %v639 = vand.u32 %v522, 4294901760
        %v640 = vsub.f32 %v522, %v639
        %v641 = vand.u32 %v640, 4294901760
        %642 = vmatpush.xpose.msra.mxu0 %v641
        %v643 = vand.u32 %v520, 4294901760
        %644 = vmatmul.f32.gmra.mxu0 %v643
        %v645 = vpop.f32.mrf.mxu0
        %v646 = vadd.f32 %v622, %v645
        %647 = vdwg.mxu0
        %648 = vmatpush.xpose.msra.mxu0 0.0
        %649 = vmatpush.xpose.msra.mxu0 0.0
        %650 = vmatpush.xpose.msra.mxu0 0.0
        %651 = vmatpush.xpose.msra.mxu0 0.0
        %652 = vmatpush.xpose.msra.mxu0 0.0
        %653 = vmatpush.xpose.msra.mxu0 0.0
        %654 = vmatpush.xpose.msra.mxu0 0.0
        %655 = vmatpush.xpose.msra.mxu0 0.0
        %656 = vmatpush.xpose.msra.mxu0 0.0
        %657 = vmatpush.xpose.msra.mxu0 0.0
        %658 = vmatpush.xpose.msra.mxu0 0.0
        %659 = vmatpush.xpose.msra.mxu0 0.0
        %660 = vmatpush.xpose.msra.mxu0 0.0
        %661 = vmatpush.xpose.msra.mxu0 0.0
        %662 = vmatpush.xpose.msra.mxu0 0.0
        %v663 = vand.u32 %v522, 4294901760
        %664 = vmatpush.xpose.msra.mxu0 %v663
        %v665 = vand.u32 %v520, 4294901760
        %666 = vmatmul.f32.gmra.mxu0 %v665
        %v667 = vpop.f32.mrf.mxu0
        %v668 = vadd.f32 %v646, %v667
        %669 = vdwg.mxu0
        %v670 = vsel %vm519, %v668, -inf
        %671 = vmax.xlane.f32.xlu0 %v670
        %v672 = vpop.xlane.xlu0 %671
        %v673 = vsub.f32 %v668, %v672
        %v674 = vmul.f32 %v673, 1.442695
        %v675 = vpow.pop %v674
        %v676 = vsel %vm519, %v675, 0.0
        %677 = vadd.xlane.f32.xlu0 %v676
        %v678 = vpop.xlane.xlu0 %677
        %v679 = vrcp.pop %v678
        %v680 = vmul.f32 %v678, %v679
        %v681 = vsub.f32 1.0, %v680
        %v682 = vmul.f32 %v679, %v681
        %v683 = vadd.f32 %v679, %v682
        %vm684 = vweird.f32 %v678
        %vm685 = vweird.f32 %v679
        %vm686 = vmor %vm684, %vm685
        %v687 = vsel %vm686, %v679, %v683
        %v688 = vand.u32 2147483647, %v678
        %vm689 = vcmp.eq.f32.partialorder %v688, 8.507059e+37
        %v690 = vand.u32 %v678, 2147483648
        %v691 = vor.u32 1.1754944e-38, %v690
        %v692 = vsel %vm689, %v691, %v687
        %v693 = vmul.f32 %v675, %v692
        %694 = vrot.lane.b32.xlu0 %v513, 64
        %v695 = vpop.permute.xlu0 %694
        %v698 = vsel %vm519, %v693, 0
        %700 = vmatpush.msra.mxu0 0.0
        %701 = vmatpush.msra.mxu0 0.0
        %702 = vmatpush.msra.mxu0 0.0
        %703 = vmatpush.msra.mxu0 0.0
        %704 = vmatpush.msra.mxu0 0.0
        %705 = vmatpush.msra.mxu0 0.0
        %706 = vmatpush.msra.mxu0 0.0
        %707 = vmatpush.msra.mxu0 0.0
        %708 = vmatpush.msra.mxu0 0.0
        %709 = vmatpush.msra.mxu0 0.0
        %710 = vmatpush.msra.mxu0 0.0
        %711 = vmatpush.msra.mxu0 0.0
        %712 = vmatpush.msra.mxu0 0.0
        %713 = vmatpush.msra.mxu0 0.0
        %714 = vmatpush.msra.mxu0 0.0
        %v715 = vand.u32 %v695, 4294901760
        %716 = vmatpush.msra.mxu0 %v715
        %v717 = vand.u32 %v698, 4294901760
        %v718 = vsub.f32 %v698, %v717
        %v719 = vand.u32 %v718, 4294901760
        %v720 = vsub.f32 %v718, %v719
        %v721 = vand.u32 %v720, 4294901760
        %722 = vmatmul.f32.gmra.mxu0 %v721
        %v723 = vpop.f32.mrf.mxu0
        %v724 = vadd.f32 0.0, %v723
        %725 = vdwg.mxu0
        %726 = vmatpush.msra.mxu0 0.0
        %727 = vmatpush.msra.mxu0 0.0
        %728 = vmatpush.msra.mxu0 0.0
        %729 = vmatpush.msra.mxu0 0.0
        %730 = vmatpush.msra.mxu0 0.0
        %731 = vmatpush.msra.mxu0 0.0
        %732 = vmatpush.msra.mxu0 0.0
        %733 = vmatpush.msra.mxu0 0.0
        %734 = vmatpush.msra.mxu0 0.0
        %735 = vmatpush.msra.mxu0 0.0
        %736 = vmatpush.msra.mxu0 0.0
        %737 = vmatpush.msra.mxu0 0.0
        %738 = vmatpush.msra.mxu0 0.0
        %739 = vmatpush.msra.mxu0 0.0
        %740 = vmatpush.msra.mxu0 0.0
        %v741 = vand.u32 %v695, 4294901760
        %v742 = vsub.f32 %v695, %v741
        %v743 = vand.u32 %v742, 4294901760
        %v744 = vsub.f32 %v742, %v743
        %v745 = vand.u32 %v744, 4294901760
        %746 = vmatpush.msra.mxu0 %v745
        %v747 = vand.u32 %v698, 4294901760
        %748 = vmatmul.f32.gmra.mxu0 %v747
        %v749 = vpop.f32.mrf.mxu0
        %v750 = vadd.f32 %v724, %v749
        %751 = vdwg.mxu0
        %752 = vmatpush.msra.mxu0 0.0
        %753 = vmatpush.msra.mxu0 0.0
        %754 = vmatpush.msra.mxu0 0.0
        %755 = vmatpush.msra.mxu0 0.0
        %756 = vmatpush.msra.mxu0 0.0
        %757 = vmatpush.msra.mxu0 0.0
        %758 = vmatpush.msra.mxu0 0.0
        %759 = vmatpush.msra.mxu0 0.0
        %760 = vmatpush.msra.mxu0 0.0
        %761 = vmatpush.msra.mxu0 0.0
        %762 = vmatpush.msra.mxu0 0.0
        %763 = vmatpush.msra.mxu0 0.0
        %764 = vmatpush.msra.mxu0 0.0
        %765 = vmatpush.msra.mxu0 0.0
        %766 = vmatpush.msra.mxu0 0.0
        %v767 = vand.u32 %v695, 4294901760
        %v768 = vsub.f32 %v695, %v767
        %769 = vmatpush.msra.mxu0 %v768
        %v770 = vand.u32 %v698, 4294901760
        %v771 = vsub.f32 %v698, %v770
        %772 = vmatmul.f32.gmra.mxu0 %v771
        %v773 = vpop.f32.mrf.mxu0
        %v774 = vadd.f32 %v750, %v773
        %775 = vdwg.mxu0
        %776 = vmatpush.msra.mxu0 0.0
        %777 = vmatpush.msra.mxu0 0.0
        %778 = vmatpush.msra.mxu0 0.0
        %779 = vmatpush.msra.mxu0 0.0
        %780 = vmatpush.msra.mxu0 0.0
        %781 = vmatpush.msra.mxu0 0.0
        %782 = vmatpush.msra.mxu0 0.0
        %783 = vmatpush.msra.mxu0 0.0
        %784 = vmatpush.msra.mxu0 0.0
        %785 = vmatpush.msra.mxu0 0.0
        %786 = vmatpush.msra.mxu0 0.0
        %787 = vmatpush.msra.mxu0 0.0
        %788 = vmatpush.msra.mxu0 0.0
        %789 = vmatpush.msra.mxu0 0.0
        %790 = vmatpush.msra.mxu0 0.0
        %v791 = vand.u32 %v695, 4294901760
        %792 = vmatpush.msra.mxu0 %v791
        %v793 = vand.u32 %v698, 4294901760
        %v794 = vsub.f32 %v698, %v793
        %v795 = vand.u32 %v794, 4294901760
        %796 = vmatmul.f32.gmra.mxu0 %v795
        %v797 = vpop.f32.mrf.mxu0
        %v798 = vadd.f32 %v774, %v797
        %799 = vdwg.mxu0
        %800 = vmatpush.msra.mxu0 0.0
        %801 = vmatpush.msra.mxu0 0.0
        %802 = vmatpush.msra.mxu0 0.0
        %803 = vmatpush.msra.mxu0 0.0
        %804 = vmatpush.msra.mxu0 0.0
        %805 = vmatpush.msra.mxu0 0.0
        %806 = vmatpush.msra.mxu0 0.0
        %807 = vmatpush.msra.mxu0 0.0
        %808 = vmatpush.msra.mxu0 0.0
        %809 = vmatpush.msra.mxu0 0.0
        %810 = vmatpush.msra.mxu0 0.0
        %811 = vmatpush.msra.mxu0 0.0
        %812 = vmatpush.msra.mxu0 0.0
        %813 = vmatpush.msra.mxu0 0.0
        %814 = vmatpush.msra.mxu0 0.0
        %v815 = vand.u32 %v695, 4294901760
        %v816 = vsub.f32 %v695, %v815
        %v817 = vand.u32 %v816, 4294901760
        %818 = vmatpush.msra.mxu0 %v817
        %v819 = vand.u32 %v698, 4294901760
        %820 = vmatmul.f32.gmra.mxu0 %v819
        %v821 = vpop.f32.mrf.mxu0
        %v822 = vadd.f32 %v798, %v821
        %823 = vdwg.mxu0
        %824 = vmatpush.msra.mxu0 0.0
        %825 = vmatpush.msra.mxu0 0.0
        %826 = vmatpush.msra.mxu0 0.0
        %827 = vmatpush.msra.mxu0 0.0
        %828 = vmatpush.msra.mxu0 0.0
        %829 = vmatpush.msra.mxu0 0.0
        %830 = vmatpush.msra.mxu0 0.0
        %831 = vmatpush.msra.mxu0 0.0
        %832 = vmatpush.msra.mxu0 0.0
        %833 = vmatpush.msra.mxu0 0.0
        %834 = vmatpush.msra.mxu0 0.0
        %835 = vmatpush.msra.mxu0 0.0
        %836 = vmatpush.msra.mxu0 0.0
        %837 = vmatpush.msra.mxu0 0.0
        %838 = vmatpush.msra.mxu0 0.0
        %v839 = vand.u32 %v695, 4294901760
        %840 = vmatpush.msra.mxu0 %v839
        %v841 = vand.u32 %v698, 4294901760
        %842 = vmatmul.f32.gmra.mxu0 %v841
        %v843 = vpop.f32.mrf.mxu0
        %v844 = vadd.f32 %v822, %v843
        %845 = vdwg.mxu0
        %846 = vrot.lane.b32.xlu0 %v513, 120
        %v847 = vpop.permute.xlu0 %846
        %848 = vrot.lane.b32.xlu0 %v513, 88
        %v849 = vpop.permute.xlu0 %848
        %v850 = vsel %vm519, %v847, 0
        %v852 = vsel %vm519, %v849, 0
        %854 = vmatpush.xpose.msra.mxu0 0.0
        %855 = vmatpush.xpose.msra.mxu0 0.0
        %856 = vmatpush.xpose.msra.mxu0 0.0
        %857 = vmatpush.xpose.msra.mxu0 0.0
        %858 = vmatpush.xpose.msra.mxu0 0.0
        %859 = vmatpush.xpose.msra.mxu0 0.0
        %860 = vmatpush.xpose.msra.mxu0 0.0
        %861 = vmatpush.xpose.msra.mxu0 0.0
        %862 = vmatpush.xpose.msra.mxu0 0.0
        %863 = vmatpush.xpose.msra.mxu0 0.0
        %864 = vmatpush.xpose.msra.mxu0 0.0
        %865 = vmatpush.xpose.msra.mxu0 0.0
        %866 = vmatpush.xpose.msra.mxu0 0.0
        %867 = vmatpush.xpose.msra.mxu0 0.0
        %868 = vmatpush.xpose.msra.mxu0 0.0
        %v869 = vand.u32 %v852, 4294901760
        %870 = vmatpush.xpose.msra.mxu0 %v869
        %v871 = vand.u32 %v850, 4294901760
        %v872 = vsub.f32 %v850, %v871
        %v873 = vand.u32 %v872, 4294901760
        %v874 = vsub.f32 %v872, %v873
        %v875 = vand.u32 %v874, 4294901760
        %876 = vmatmul.f32.gmra.mxu0 %v875
        %v877 = vpop.f32.mrf.mxu0
        %v878 = vadd.f32 %v515, %v877
        %879 = vdwg.mxu0
        %880 = vmatpush.xpose.msra.mxu0 0.0
        %881 = vmatpush.xpose.msra.mxu0 0.0
        %882 = vmatpush.xpose.msra.mxu0 0.0
        %883 = vmatpush.xpose.msra.mxu0 0.0
        %884 = vmatpush.xpose.msra.mxu0 0.0
        %885 = vmatpush.xpose.msra.mxu0 0.0
        %886 = vmatpush.xpose.msra.mxu0 0.0
        %887 = vmatpush.xpose.msra.mxu0 0.0
        %888 = vmatpush.xpose.msra.mxu0 0.0
        %889 = vmatpush.xpose.msra.mxu0 0.0
        %890 = vmatpush.xpose.msra.mxu0 0.0
        %891 = vmatpush.xpose.msra.mxu0 0.0
        %892 = vmatpush.xpose.msra.mxu0 0.0
        %893 = vmatpush.xpose.msra.mxu0 0.0
        %894 = vmatpush.xpose.msra.mxu0 0.0
        %v895 = vand.u32 %v852, 4294901760
        %v896 = vsub.f32 %v852, %v895
        %v897 = vand.u32 %v896, 4294901760
        %v898 = vsub.f32 %v896, %v897
        %v899 = vand.u32 %v898, 4294901760
        %900 = vmatpush.xpose.msra.mxu0 %v899
        %v901 = vand.u32 %v850, 4294901760
        %902 = vmatmul.f32.gmra.mxu0 %v901
        %v903 = vpop.f32.mrf.mxu0
        %v904 = vadd.f32 %v878, %v903
        %905 = vdwg.mxu0
        %906 = vmatpush.xpose.msra.mxu0 0.0
        %907 = vmatpush.xpose.msra.mxu0 0.0
        %908 = vmatpush.xpose.msra.mxu0 0.0
        %909 = vmatpush.xpose.msra.mxu0 0.0
        %910 = vmatpush.xpose.msra.mxu0 0.0
        %911 = vmatpush.xpose.msra.mxu0 0.0
        %912 = vmatpush.xpose.msra.mxu0 0.0
        %913 = vmatpush.xpose.msra.mxu0 0.0
        %914 = vmatpush.xpose.msra.mxu0 0.0
        %915 = vmatpush.xpose.msra.mxu0 0.0
        %916 = vmatpush.xpose.msra.mxu0 0.0
        %917 = vmatpush.xpose.msra.mxu0 0.0
        %918 = vmatpush.xpose.msra.mxu0 0.0
        %919 = vmatpush.xpose.msra.mxu0 0.0
        %920 = vmatpush.xpose.msra.mxu0 0.0
        %v921 = vand.u32 %v852, 4294901760
        %v922 = vsub.f32 %v852, %v921
        %923 = vmatpush.xpose.msra.mxu0 %v922
        %v924 = vand.u32 %v850, 4294901760
        %v925 = vsub.f32 %v850, %v924
        %926 = vmatmul.f32.gmra.mxu0 %v925
        %v927 = vpop.f32.mrf.mxu0
        %v928 = vadd.f32 %v904, %v927
        %929 = vdwg.mxu0
        %930 = vmatpush.xpose.msra.mxu0 0.0
        %931 = vmatpush.xpose.msra.mxu0 0.0
        %932 = vmatpush.xpose.msra.mxu0 0.0
        %933 = vmatpush.xpose.msra.mxu0 0.0
        %934 = vmatpush.xpose.msra.mxu0 0.0
        %935 = vmatpush.xpose.msra.mxu0 0.0
        %936 = vmatpush.xpose.msra.mxu0 0.0
        %937 = vmatpush.xpose.msra.mxu0 0.0
        %938 = vmatpush.xpose.msra.mxu0 0.0
        %939 = vmatpush.xpose.msra.mxu0 0.0
        %940 = vmatpush.xpose.msra.mxu0 0.0
        %941 = vmatpush.xpose.msra.mxu0 0.0
        %942 = vmatpush.xpose.msra.mxu0 0.0
        %943 = vmatpush.xpose.msra.mxu0 0.0
        %944 = vmatpush.xpose.msra.mxu0 0.0
        %v945 = vand.u32 %v852, 4294901760
        %946 = vmatpush.xpose.msra.mxu0 %v945
        %v947 = vand.u32 %v850, 4294901760
        %v948 = vsub.f32 %v850, %v947
        %v949 = vand.u32 %v948, 4294901760
        %950 = vmatmul.f32.gmra.mxu0 %v949
        %v951 = vpop.f32.mrf.mxu0
        %v952 = vadd.f32 %v928, %v951
        %953 = vdwg.mxu0
        %954 = vmatpush.xpose.msra.mxu0 0.0
        %955 = vmatpush.xpose.msra.mxu0 0.0
        %956 = vmatpush.xpose.msra.mxu0 0.0
        %957 = vmatpush.xpose.msra.mxu0 0.0
        %958 = vmatpush.xpose.msra.mxu0 0.0
        %959 = vmatpush.xpose.msra.mxu0 0.0
        %960 = vmatpush.xpose.msra.mxu0 0.0
        %961 = vmatpush.xpose.msra.mxu0 0.0
        %962 = vmatpush.xpose.msra.mxu0 0.0
        %963 = vmatpush.xpose.msra.mxu0 0.0
        %964 = vmatpush.xpose.msra.mxu0 0.0
        %965 = vmatpush.xpose.msra.mxu0 0.0
        %966 = vmatpush.xpose.msra.mxu0 0.0
        %967 = vmatpush.xpose.msra.mxu0 0.0
        %968 = vmatpush.xpose.msra.mxu0 0.0
        %v969 = vand.u32 %v852, 4294901760
        %v970 = vsub.f32 %v852, %v969
        %v971 = vand.u32 %v970, 4294901760
        %972 = vmatpush.xpose.msra.mxu0 %v971
        %v973 = vand.u32 %v850, 4294901760
        %974 = vmatmul.f32.gmra.mxu0 %v973
        %v975 = vpop.f32.mrf.mxu0
        %v976 = vadd.f32 %v952, %v975
        %977 = vdwg.mxu0
        %978 = vmatpush.xpose.msra.mxu0 0.0
        %979 = vmatpush.xpose.msra.mxu0 0.0
        %980 = vmatpush.xpose.msra.mxu0 0.0
        %981 = vmatpush.xpose.msra.mxu0 0.0
        %982 = vmatpush.xpose.msra.mxu0 0.0
        %983 = vmatpush.xpose.msra.mxu0 0.0
        %984 = vmatpush.xpose.msra.mxu0 0.0
        %985 = vmatpush.xpose.msra.mxu0 0.0
        %986 = vmatpush.xpose.msra.mxu0 0.0
        %987 = vmatpush.xpose.msra.mxu0 0.0
        %988 = vmatpush.xpose.msra.mxu0 0.0
        %989 = vmatpush.xpose.msra.mxu0 0.0
        %990 = vmatpush.xpose.msra.mxu0 0.0
        %991 = vmatpush.xpose.msra.mxu0 0.0
        %992 = vmatpush.xpose.msra.mxu0 0.0
        %v993 = vand.u32 %v852, 4294901760
        %994 = vmatpush.xpose.msra.mxu0 %v993
        %v995 = vand.u32 %v850, 4294901760
        %996 = vmatmul.f32.gmra.mxu0 %v995
        %v997 = vpop.f32.mrf.mxu0
        %v998 = vadd.f32 %v976, %v997
        %999 = vdwg.mxu0
        %v1000 = vsel %vm519, %v998, -inf
        %1001 = vmax.xlane.f32.xlu0 %v1000
        %v1002 = vpop.xlane.xlu0 %1001
        %v1003 = vsub.f32 %v998, %v1002
        %v1004 = vmul.f32 %v1003, 1.442695
        %v1005 = vpow.pop %v1004
        %v1006 = vsel %vm519, %v1005, 0.0
        %1007 = vadd.xlane.f32.xlu0 %v1006
        %v1008 = vpop.xlane.xlu0 %1007
        %v1009 = vrcp.pop %v1008
        %v1010 = vmul.f32 %v1008, %v1009
        %v1011 = vsub.f32 1.0, %v1010
        %v1012 = vmul.f32 %v1009, %v1011
        %v1013 = vadd.f32 %v1009, %v1012
        %vm1014 = vweird.f32 %v1008
        %vm1015 = vweird.f32 %v1009
        %vm1016 = vmor %vm1014, %vm1015
        %v1017 = vsel %vm1016, %v1009, %v1013
        %v1018 = vand.u32 2147483647, %v1008
        %vm1019 = vcmp.eq.f32.partialorder %v1018, 8.507059e+37
        %v1020 = vand.u32 %v1008, 2147483648
        %v1021 = vor.u32 1.1754944e-38, %v1020
        %v1022 = vsel %vm1019, %v1021, %v1017
        %v1023 = vmul.f32 %v1005, %v1022
        %1024 = vrot.lane.b32.xlu0 %v513, 56
        %v1025 = vpop.permute.xlu0 %1024
        %v1028 = vsel %vm519, %v1023, 0
        %1030 = vmatpush.msra.mxu0 0.0
        %1031 = vmatpush.msra.mxu0 0.0
        %1032 = vmatpush.msra.mxu0 0.0
        %1033 = vmatpush.msra.mxu0 0.0
        %1034 = vmatpush.msra.mxu0 0.0
        %1035 = vmatpush.msra.mxu0 0.0
        %1036 = vmatpush.msra.mxu0 0.0
        %1037 = vmatpush.msra.mxu0 0.0
        %1038 = vmatpush.msra.mxu0 0.0
        %1039 = vmatpush.msra.mxu0 0.0
        %1040 = vmatpush.msra.mxu0 0.0
        %1041 = vmatpush.msra.mxu0 0.0
        %1042 = vmatpush.msra.mxu0 0.0
        %1043 = vmatpush.msra.mxu0 0.0
        %1044 = vmatpush.msra.mxu0 0.0
        %v1045 = vand.u32 %v1025, 4294901760
        %1046 = vmatpush.msra.mxu0 %v1045
        %v1047 = vand.u32 %v1028, 4294901760
        %v1048 = vsub.f32 %v1028, %v1047
        %v1049 = vand.u32 %v1048, 4294901760
        %v1050 = vsub.f32 %v1048, %v1049
        %v1051 = vand.u32 %v1050, 4294901760
        %1052 = vmatmul.f32.gmra.mxu0 %v1051
        %v1053 = vpop.f32.mrf.mxu0
        %v1054 = vadd.f32 0.0, %v1053
        %1055 = vdwg.mxu0
        %1056 = vmatpush.msra.mxu0 0.0
        %1057 = vmatpush.msra.mxu0 0.0
        %1058 = vmatpush.msra.mxu0 0.0
        %1059 = vmatpush.msra.mxu0 0.0
        %1060 = vmatpush.msra.mxu0 0.0
        %1061 = vmatpush.msra.mxu0 0.0
        %1062 = vmatpush.msra.mxu0 0.0
        %1063 = vmatpush.msra.mxu0 0.0
        %1064 = vmatpush.msra.mxu0 0.0
        %1065 = vmatpush.msra.mxu0 0.0
        %1066 = vmatpush.msra.mxu0 0.0
        %1067 = vmatpush.msra.mxu0 0.0
        %1068 = vmatpush.msra.mxu0 0.0
        %1069 = vmatpush.msra.mxu0 0.0
        %1070 = vmatpush.msra.mxu0 0.0
        %v1071 = vand.u32 %v1025, 4294901760
        %v1072 = vsub.f32 %v1025, %v1071
        %v1073 = vand.u32 %v1072, 4294901760
        %v1074 = vsub.f32 %v1072, %v1073
        %v1075 = vand.u32 %v1074, 4294901760
        %1076 = vmatpush.msra.mxu0 %v1075
        %v1077 = vand.u32 %v1028, 4294901760
        %1078 = vmatmul.f32.gmra.mxu0 %v1077
        %v1079 = vpop.f32.mrf.mxu0
        %v1080 = vadd.f32 %v1054, %v1079
        %1081 = vdwg.mxu0
        %1082 = vmatpush.msra.mxu0 0.0
        %1083 = vmatpush.msra.mxu0 0.0
        %1084 = vmatpush.msra.mxu0 0.0
        %1085 = vmatpush.msra.mxu0 0.0
        %1086 = vmatpush.msra.mxu0 0.0
        %1087 = vmatpush.msra.mxu0 0.0
        %1088 = vmatpush.msra.mxu0 0.0
        %1089 = vmatpush.msra.mxu0 0.0
        %1090 = vmatpush.msra.mxu0 0.0
        %1091 = vmatpush.msra.mxu0 0.0
        %1092 = vmatpush.msra.mxu0 0.0
        %1093 = vmatpush.msra.mxu0 0.0
        %1094 = vmatpush.msra.mxu0 0.0
        %1095 = vmatpush.msra.mxu0 0.0
        %1096 = vmatpush.msra.mxu0 0.0
        %v1097 = vand.u32 %v1025, 4294901760
        %v1098 = vsub.f32 %v1025, %v1097
        %1099 = vmatpush.msra.mxu0 %v1098
        %v1100 = vand.u32 %v1028, 4294901760
        %v1101 = vsub.f32 %v1028, %v1100
        %1102 = vmatmul.f32.gmra.mxu0 %v1101
        %v1103 = vpop.f32.mrf.mxu0
        %v1104 = vadd.f32 %v1080, %v1103
        %1105 = vdwg.mxu0
        %1106 = vmatpush.msra.mxu0 0.0
        %1107 = vmatpush.msra.mxu0 0.0
        %1108 = vmatpush.msra.mxu0 0.0
        %1109 = vmatpush.msra.mxu0 0.0
        %1110 = vmatpush.msra.mxu0 0.0
        %1111 = vmatpush.msra.mxu0 0.0
        %1112 = vmatpush.msra.mxu0 0.0
        %1113 = vmatpush.msra.mxu0 0.0
        %1114 = vmatpush.msra.mxu0 0.0
        %1115 = vmatpush.msra.mxu0 0.0
        %1116 = vmatpush.msra.mxu0 0.0
        %1117 = vmatpush.msra.mxu0 0.0
        %1118 = vmatpush.msra.mxu0 0.0
        %1119 = vmatpush.msra.mxu0 0.0
        %1120 = vmatpush.msra.mxu0 0.0
        %v1121 = vand.u32 %v1025, 4294901760
        %1122 = vmatpush.msra.mxu0 %v1121
        %v1123 = vand.u32 %v1028, 4294901760
        %v1124 = vsub.f32 %v1028, %v1123
        %v1125 = vand.u32 %v1124, 4294901760
        %1126 = vmatmul.f32.gmra.mxu0 %v1125
        %v1127 = vpop.f32.mrf.mxu0
        %v1128 = vadd.f32 %v1104, %v1127
        %1129 = vdwg.mxu0
        %1130 = vmatpush.msra.mxu0 0.0
        %1131 = vmatpush.msra.mxu0 0.0
        %1132 = vmatpush.msra.mxu0 0.0
        %1133 = vmatpush.msra.mxu0 0.0
        %1134 = vmatpush.msra.mxu0 0.0
        %1135 = vmatpush.msra.mxu0 0.0
        %1136 = vmatpush.msra.mxu0 0.0
        %1137 = vmatpush.msra.mxu0 0.0
        %1138 = vmatpush.msra.mxu0 0.0
        %1139 = vmatpush.msra.mxu0 0.0
        %1140 = vmatpush.msra.mxu0 0.0
        %1141 = vmatpush.msra.mxu0 0.0
        %1142 = vmatpush.msra.mxu0 0.0
        %1143 = vmatpush.msra.mxu0 0.0
        %1144 = vmatpush.msra.mxu0 0.0
        %v1145 = vand.u32 %v1025, 4294901760
        %v1146 = vsub.f32 %v1025, %v1145
        %v1147 = vand.u32 %v1146, 4294901760
        %1148 = vmatpush.msra.mxu0 %v1147
        %v1149 = vand.u32 %v1028, 4294901760
        %1150 = vmatmul.f32.gmra.mxu0 %v1149
        %v1151 = vpop.f32.mrf.mxu0
        %v1152 = vadd.f32 %v1128, %v1151
        %1153 = vdwg.mxu0
        %1154 = vmatpush.msra.mxu0 0.0
        %1155 = vmatpush.msra.mxu0 0.0
        %1156 = vmatpush.msra.mxu0 0.0
        %1157 = vmatpush.msra.mxu0 0.0
        %1158 = vmatpush.msra.mxu0 0.0
        %1159 = vmatpush.msra.mxu0 0.0
        %1160 = vmatpush.msra.mxu0 0.0
        %1161 = vmatpush.msra.mxu0 0.0
        %1162 = vmatpush.msra.mxu0 0.0
        %1163 = vmatpush.msra.mxu0 0.0
        %1164 = vmatpush.msra.mxu0 0.0
        %1165 = vmatpush.msra.mxu0 0.0
        %1166 = vmatpush.msra.mxu0 0.0
        %1167 = vmatpush.msra.mxu0 0.0
        %1168 = vmatpush.msra.mxu0 0.0
        %v1169 = vand.u32 %v1025, 4294901760
        %1170 = vmatpush.msra.mxu0 %v1169
        %v1171 = vand.u32 %v1028, 4294901760
        %1172 = vmatmul.f32.gmra.mxu0 %v1171
        %v1173 = vpop.f32.mrf.mxu0
        %v1174 = vadd.f32 %v1152, %v1173
        %1175 = vdwg.mxu0
        %1176 = vrot.lane.b32.xlu0 %v513, 112
        %v1177 = vpop.permute.xlu0 %1176
        %1178 = vrot.lane.b32.xlu0 %v513, 80
        %v1179 = vpop.permute.xlu0 %1178
        %v1180 = vsel %vm519, %v1177, 0
        %v1182 = vsel %vm519, %v1179, 0
        %1184 = vmatpush.xpose.msra.mxu0 0.0
        %1185 = vmatpush.xpose.msra.mxu0 0.0
        %1186 = vmatpush.xpose.msra.mxu0 0.0
        %1187 = vmatpush.xpose.msra.mxu0 0.0
        %1188 = vmatpush.xpose.msra.mxu0 0.0
        %1189 = vmatpush.xpose.msra.mxu0 0.0
        %1190 = vmatpush.xpose.msra.mxu0 0.0
        %1191 = vmatpush.xpose.msra.mxu0 0.0
        %1192 = vmatpush.xpose.msra.mxu0 0.0
        %1193 = vmatpush.xpose.msra.mxu0 0.0
        %1194 = vmatpush.xpose.msra.mxu0 0.0
        %1195 = vmatpush.xpose.msra.mxu0 0.0
        %1196 = vmatpush.xpose.msra.mxu0 0.0
        %1197 = vmatpush.xpose.msra.mxu0 0.0
        %1198 = vmatpush.xpose.msra.mxu0 0.0
        %v1199 = vand.u32 %v1182, 4294901760
        %1200 = vmatpush.xpose.msra.mxu0 %v1199
        %v1201 = vand.u32 %v1180, 4294901760
        %v1202 = vsub.f32 %v1180, %v1201
        %v1203 = vand.u32 %v1202, 4294901760
        %v1204 = vsub.f32 %v1202, %v1203
        %v1205 = vand.u32 %v1204, 4294901760
        %1206 = vmatmul.f32.gmra.mxu0 %v1205
        %v1207 = vpop.f32.mrf.mxu0
        %v1208 = vadd.f32 %v515, %v1207
        %1209 = vdwg.mxu0
        %1210 = vmatpush.xpose.msra.mxu0 0.0
        %1211 = vmatpush.xpose.msra.mxu0 0.0
        %1212 = vmatpush.xpose.msra.mxu0 0.0
        %1213 = vmatpush.xpose.msra.mxu0 0.0
        %1214 = vmatpush.xpose.msra.mxu0 0.0
        %1215 = vmatpush.xpose.msra.mxu0 0.0
        %1216 = vmatpush.xpose.msra.mxu0 0.0
        %1217 = vmatpush.xpose.msra.mxu0 0.0
        %1218 = vmatpush.xpose.msra.mxu0 0.0
        %1219 = vmatpush.xpose.msra.mxu0 0.0
        %1220 = vmatpush.xpose.msra.mxu0 0.0
        %1221 = vmatpush.xpose.msra.mxu0 0.0
        %1222 = vmatpush.xpose.msra.mxu0 0.0
        %1223 = vmatpush.xpose.msra.mxu0 0.0
        %1224 = vmatpush.xpose.msra.mxu0 0.0
        %v1225 = vand.u32 %v1182, 4294901760
        %v1226 = vsub.f32 %v1182, %v1225
        %v1227 = vand.u32 %v1226, 4294901760
        %v1228 = vsub.f32 %v1226, %v1227
        %v1229 = vand.u32 %v1228, 4294901760
        %1230 = vmatpush.xpose.msra.mxu0 %v1229
        %v1231 = vand.u32 %v1180, 4294901760
        %1232 = vmatmul.f32.gmra.mxu0 %v1231
        %v1233 = vpop.f32.mrf.mxu0
        %v1234 = vadd.f32 %v1208, %v1233
        %1235 = vdwg.mxu0
        %1236 = vmatpush.xpose.msra.mxu0 0.0
        %1237 = vmatpush.xpose.msra.mxu0 0.0
        %1238 = vmatpush.xpose.msra.mxu0 0.0
        %1239 = vmatpush.xpose.msra.mxu0 0.0
        %1240 = vmatpush.xpose.msra.mxu0 0.0
        %1241 = vmatpush.xpose.msra.mxu0 0.0
        %1242 = vmatpush.xpose.msra.mxu0 0.0
        %1243 = vmatpush.xpose.msra.mxu0 0.0
        %1244 = vmatpush.xpose.msra.mxu0 0.0
        %1245 = vmatpush.xpose.msra.mxu0 0.0
        %1246 = vmatpush.xpose.msra.mxu0 0.0
        %1247 = vmatpush.xpose.msra.mxu0 0.0
        %1248 = vmatpush.xpose.msra.mxu0 0.0
        %1249 = vmatpush.xpose.msra.mxu0 0.0
        %1250 = vmatpush.xpose.msra.mxu0 0.0
        %v1251 = vand.u32 %v1182, 4294901760
        %v1252 = vsub.f32 %v1182, %v1251
        %1253 = vmatpush.xpose.msra.mxu0 %v1252
        %v1254 = vand.u32 %v1180, 4294901760
        %v1255 = vsub.f32 %v1180, %v1254
        %1256 = vmatmul.f32.gmra.mxu0 %v1255
        %v1257 = vpop.f32.mrf.mxu0
        %v1258 = vadd.f32 %v1234, %v1257
        %1259 = vdwg.mxu0
        %1260 = vmatpush.xpose.msra.mxu0 0.0
        %1261 = vmatpush.xpose.msra.mxu0 0.0
        %1262 = vmatpush.xpose.msra.mxu0 0.0
        %1263 = vmatpush.xpose.msra.mxu0 0.0
        %1264 = vmatpush.xpose.msra.mxu0 0.0
        %1265 = vmatpush.xpose.msra.mxu0 0.0
        %1266 = vmatpush.xpose.msra.mxu0 0.0
        %1267 = vmatpush.xpose.msra.mxu0 0.0
        %1268 = vmatpush.xpose.msra.mxu0 0.0
        %1269 = vmatpush.xpose.msra.mxu0 0.0
        %1270 = vmatpush.xpose.msra.mxu0 0.0
        %1271 = vmatpush.xpose.msra.mxu0 0.0
        %1272 = vmatpush.xpose.msra.mxu0 0.0
        %1273 = vmatpush.xpose.msra.mxu0 0.0
        %1274 = vmatpush.xpose.msra.mxu0 0.0
        %v1275 = vand.u32 %v1182, 4294901760
        %1276 = vmatpush.xpose.msra.mxu0 %v1275
        %v1277 = vand.u32 %v1180, 4294901760
        %v1278 = vsub.f32 %v1180, %v1277
        %v1279 = vand.u32 %v1278, 4294901760
        %1280 = vmatmul.f32.gmra.mxu0 %v1279
        %v1281 = vpop.f32.mrf.mxu0
        %v1282 = vadd.f32 %v1258, %v1281
        %1283 = vdwg.mxu0
        %1284 = vmatpush.xpose.msra.mxu0 0.0
        %1285 = vmatpush.xpose.msra.mxu0 0.0
        %1286 = vmatpush.xpose.msra.mxu0 0.0
        %1287 = vmatpush.xpose.msra.mxu0 0.0
        %1288 = vmatpush.xpose.msra.mxu0 0.0
        %1289 = vmatpush.xpose.msra.mxu0 0.0
        %1290 = vmatpush.xpose.msra.mxu0 0.0
        %1291 = vmatpush.xpose.msra.mxu0 0.0
        %1292 = vmatpush.xpose.msra.mxu0 0.0
        %1293 = vmatpush.xpose.msra.mxu0 0.0
        %1294 = vmatpush.xpose.msra.mxu0 0.0
        %1295 = vmatpush.xpose.msra.mxu0 0.0
        %1296 = vmatpush.xpose.msra.mxu0 0.0
        %1297 = vmatpush.xpose.msra.mxu0 0.0
        %1298 = vmatpush.xpose.msra.mxu0 0.0
        %v1299 = vand.u32 %v1182, 4294901760
        %v1300 = vsub.f32 %v1182, %v1299
        %v1301 = vand.u32 %v1300, 4294901760
        %1302 = vmatpush.xpose.msra.mxu0 %v1301
        %v1303 = vand.u32 %v1180, 4294901760
        %1304 = vmatmul.f32.gmra.mxu0 %v1303
        %v1305 = vpop.f32.mrf.mxu0
        %v1306 = vadd.f32 %v1282, %v1305
        %1307 = vdwg.mxu0
        %1308 = vmatpush.xpose.msra.mxu0 0.0
        %1309 = vmatpush.xpose.msra.mxu0 0.0
        %1310 = vmatpush.xpose.msra.mxu0 0.0
        %1311 = vmatpush.xpose.msra.mxu0 0.0
        %1312 = vmatpush.xpose.msra.mxu0 0.0
        %1313 = vmatpush.xpose.msra.mxu0 0.0
        %1314 = vmatpush.xpose.msra.mxu0 0.0
        %1315 = vmatpush.xpose.msra.mxu0 0.0
        %1316 = vmatpush.xpose.msra.mxu0 0.0
        %1317 = vmatpush.xpose.msra.mxu0 0.0
        %1318 = vmatpush.xpose.msra.mxu0 0.0
        %1319 = vmatpush.xpose.msra.mxu0 0.0
        %1320 = vmatpush.xpose.msra.mxu0 0.0
        %1321 = vmatpush.xpose.msra.mxu0 0.0
        %1322 = vmatpush.xpose.msra.mxu0 0.0
        %v1323 = vand.u32 %v1182, 4294901760
        %1324 = vmatpush.xpose.msra.mxu0 %v1323
        %v1325 = vand.u32 %v1180, 4294901760
        %1326 = vmatmul.f32.gmra.mxu0 %v1325
        %v1327 = vpop.f32.mrf.mxu0
        %v1328 = vadd.f32 %v1306, %v1327
        %1329 = vdwg.mxu0
        %v1330 = vsel %vm519, %v1328, -inf
        %1331 = vmax.xlane.f32.xlu0 %v1330
        %v1332 = vpop.xlane.xlu0 %1331
        %v1333 = vsub.f32 %v1328, %v1332
        %v1334 = vmul.f32 %v1333, 1.442695
        %v1335 = vpow.pop %v1334
        %v1336 = vsel %vm519, %v1335, 0.0
        %1337 = vadd.xlane.f32.xlu0 %v1336
        %v1338 = vpop.xlane.xlu0 %1337
        %v1339 = vrcp.pop %v1338
        %v1340 = vmul.f32 %v1338, %v1339
        %v1341 = vsub.f32 1.0, %v1340
        %v1342 = vmul.f32 %v1339, %v1341
        %v1343 = vadd.f32 %v1339, %v1342
        %vm1344 = vweird.f32 %v1338
        %vm1345 = vweird.f32 %v1339
        %vm1346 = vmor %vm1344, %vm1345
        %v1347 = vsel %vm1346, %v1339, %v1343
        %v1348 = vand.u32 2147483647, %v1338
        %vm1349 = vcmp.eq.f32.partialorder %v1348, 8.507059e+37
        %v1350 = vand.u32 %v1338, 2147483648
        %v1351 = vor.u32 1.1754944e-38, %v1350
        %v1352 = vsel %vm1349, %v1351, %v1347
        %v1353 = vmul.f32 %v1335, %v1352
        %1354 = vrot.lane.b32.xlu0 %v513, 48
        %v1355 = vpop.permute.xlu0 %1354
        %v1358 = vsel %vm519, %v1353, 0
        %1360 = vmatpush.msra.mxu0 0.0
        %1361 = vmatpush.msra.mxu0 0.0
        %1362 = vmatpush.msra.mxu0 0.0
        %1363 = vmatpush.msra.mxu0 0.0
        %1364 = vmatpush.msra.mxu0 0.0
        %1365 = vmatpush.msra.mxu0 0.0
        %1366 = vmatpush.msra.mxu0 0.0
        %1367 = vmatpush.msra.mxu0 0.0
        %1368 = vmatpush.msra.mxu0 0.0
        %1369 = vmatpush.msra.mxu0 0.0
        %1370 = vmatpush.msra.mxu0 0.0
        %1371 = vmatpush.msra.mxu0 0.0
        %1372 = vmatpush.msra.mxu0 0.0
        %1373 = vmatpush.msra.mxu0 0.0
        %1374 = vmatpush.msra.mxu0 0.0
        %v1375 = vand.u32 %v1355, 4294901760
        %1376 = vmatpush.msra.mxu0 %v1375
        %v1377 = vand.u32 %v1358, 4294901760
        %v1378 = vsub.f32 %v1358, %v1377
        %v1379 = vand.u32 %v1378, 4294901760
        %v1380 = vsub.f32 %v1378, %v1379
        %v1381 = vand.u32 %v1380, 4294901760
        %1382 = vmatmul.f32.gmra.mxu0 %v1381
        %v1383 = vpop.f32.mrf.mxu0
        %v1384 = vadd.f32 0.0, %v1383
        %1385 = vdwg.mxu0
        %1386 = vmatpush.msra.mxu0 0.0
        %1387 = vmatpush.msra.mxu0 0.0
        %1388 = vmatpush.msra.mxu0 0.0
        %1389 = vmatpush.msra.mxu0 0.0
        %1390 = vmatpush.msra.mxu0 0.0
        %1391 = vmatpush.msra.mxu0 0.0
        %1392 = vmatpush.msra.mxu0 0.0
        %1393 = vmatpush.msra.mxu0 0.0
        %1394 = vmatpush.msra.mxu0 0.0
        %1395 = vmatpush.msra.mxu0 0.0
        %1396 = vmatpush.msra.mxu0 0.0
        %1397 = vmatpush.msra.mxu0 0.0
        %1398 = vmatpush.msra.mxu0 0.0
        %1399 = vmatpush.msra.mxu0 0.0
        %1400 = vmatpush.msra.mxu0 0.0
        %v1401 = vand.u32 %v1355, 4294901760
        %v1402 = vsub.f32 %v1355, %v1401
        %v1403 = vand.u32 %v1402, 4294901760
        %v1404 = vsub.f32 %v1402, %v1403
        %v1405 = vand.u32 %v1404, 4294901760
        %1406 = vmatpush.msra.mxu0 %v1405
        %v1407 = vand.u32 %v1358, 4294901760
        %1408 = vmatmul.f32.gmra.mxu0 %v1407
        %v1409 = vpop.f32.mrf.mxu0
        %v1410 = vadd.f32 %v1384, %v1409
        %1411 = vdwg.mxu0
        %1412 = vmatpush.msra.mxu0 0.0
        %1413 = vmatpush.msra.mxu0 0.0
        %1414 = vmatpush.msra.mxu0 0.0
        %1415 = vmatpush.msra.mxu0 0.0
        %1416 = vmatpush.msra.mxu0 0.0
        %1417 = vmatpush.msra.mxu0 0.0
        %1418 = vmatpush.msra.mxu0 0.0
        %1419 = vmatpush.msra.mxu0 0.0
        %1420 = vmatpush.msra.mxu0 0.0
        %1421 = vmatpush.msra.mxu0 0.0
        %1422 = vmatpush.msra.mxu0 0.0
        %1423 = vmatpush.msra.mxu0 0.0
        %1424 = vmatpush.msra.mxu0 0.0
        %1425 = vmatpush.msra.mxu0 0.0
        %1426 = vmatpush.msra.mxu0 0.0
        %v1427 = vand.u32 %v1355, 4294901760
        %v1428 = vsub.f32 %v1355, %v1427
        %1429 = vmatpush.msra.mxu0 %v1428
        %v1430 = vand.u32 %v1358, 4294901760
        %v1431 = vsub.f32 %v1358, %v1430
        %1432 = vmatmul.f32.gmra.mxu0 %v1431
        %v1433 = vpop.f32.mrf.mxu0
        %v1434 = vadd.f32 %v1410, %v1433
        %1435 = vdwg.mxu0
        %1436 = vmatpush.msra.mxu0 0.0
        %1437 = vmatpush.msra.mxu0 0.0
        %1438 = vmatpush.msra.mxu0 0.0
        %1439 = vmatpush.msra.mxu0 0.0
        %1440 = vmatpush.msra.mxu0 0.0
        %1441 = vmatpush.msra.mxu0 0.0
        %1442 = vmatpush.msra.mxu0 0.0
        %1443 = vmatpush.msra.mxu0 0.0
        %1444 = vmatpush.msra.mxu0 0.0
        %1445 = vmatpush.msra.mxu0 0.0
        %1446 = vmatpush.msra.mxu0 0.0
        %1447 = vmatpush.msra.mxu0 0.0
        %1448 = vmatpush.msra.mxu0 0.0
        %1449 = vmatpush.msra.mxu0 0.0
        %1450 = vmatpush.msra.mxu0 0.0
        %v1451 = vand.u32 %v1355, 4294901760
        %1452 = vmatpush.msra.mxu0 %v1451
        %v1453 = vand.u32 %v1358, 4294901760
        %v1454 = vsub.f32 %v1358, %v1453
        %v1455 = vand.u32 %v1454, 4294901760
        %1456 = vmatmul.f32.gmra.mxu0 %v1455
        %v1457 = vpop.f32.mrf.mxu0
        %v1458 = vadd.f32 %v1434, %v1457
        %1459 = vdwg.mxu0
        %1460 = vmatpush.msra.mxu0 0.0
        %1461 = vmatpush.msra.mxu0 0.0
        %1462 = vmatpush.msra.mxu0 0.0
        %1463 = vmatpush.msra.mxu0 0.0
        %1464 = vmatpush.msra.mxu0 0.0
        %1465 = vmatpush.msra.mxu0 0.0
        %1466 = vmatpush.msra.mxu0 0.0
        %1467 = vmatpush.msra.mxu0 0.0
        %1468 = vmatpush.msra.mxu0 0.0
        %1469 = vmatpush.msra.mxu0 0.0
        %1470 = vmatpush.msra.mxu0 0.0
        %1471 = vmatpush.msra.mxu0 0.0
        %1472 = vmatpush.msra.mxu0 0.0
        %1473 = vmatpush.msra.mxu0 0.0
        %1474 = vmatpush.msra.mxu0 0.0
        %v1475 = vand.u32 %v1355, 4294901760
        %v1476 = vsub.f32 %v1355, %v1475
        %v1477 = vand.u32 %v1476, 4294901760
        %1478 = vmatpush.msra.mxu0 %v1477
        %v1479 = vand.u32 %v1358, 4294901760
        %1480 = vmatmul.f32.gmra.mxu0 %v1479
        %v1481 = vpop.f32.mrf.mxu0
        %v1482 = vadd.f32 %v1458, %v1481
        %1483 = vdwg.mxu0
        %1484 = vmatpush.msra.mxu0 0.0
        %1485 = vmatpush.msra.mxu0 0.0
        %1486 = vmatpush.msra.mxu0 0.0
        %1487 = vmatpush.msra.mxu0 0.0
        %1488 = vmatpush.msra.mxu0 0.0
        %1489 = vmatpush.msra.mxu0 0.0
        %1490 = vmatpush.msra.mxu0 0.0
        %1491 = vmatpush.msra.mxu0 0.0
        %1492 = vmatpush.msra.mxu0 0.0
        %1493 = vmatpush.msra.mxu0 0.0
        %1494 = vmatpush.msra.mxu0 0.0
        %1495 = vmatpush.msra.mxu0 0.0
        %1496 = vmatpush.msra.mxu0 0.0
        %1497 = vmatpush.msra.mxu0 0.0
        %1498 = vmatpush.msra.mxu0 0.0
        %v1499 = vand.u32 %v1355, 4294901760
        %1500 = vmatpush.msra.mxu0 %v1499
        %v1501 = vand.u32 %v1358, 4294901760
        %1502 = vmatmul.f32.gmra.mxu0 %v1501
        %v1503 = vpop.f32.mrf.mxu0
        %v1504 = vadd.f32 %v1482, %v1503
        %1505 = vdwg.mxu0
        %1506 = vrot.lane.b32.xlu0 %v513, 104
        %v1507 = vpop.permute.xlu0 %1506
        %1508 = vrot.lane.b32.xlu0 %v513, 72
        %v1509 = vpop.permute.xlu0 %1508
        %v1510 = vsel %vm519, %v1507, 0
        %v1512 = vsel %vm519, %v1509, 0
        %1514 = vmatpush.xpose.msra.mxu0 0.0
        %1515 = vmatpush.xpose.msra.mxu0 0.0
        %1516 = vmatpush.xpose.msra.mxu0 0.0
        %1517 = vmatpush.xpose.msra.mxu0 0.0
        %1518 = vmatpush.xpose.msra.mxu0 0.0
        %1519 = vmatpush.xpose.msra.mxu0 0.0
        %1520 = vmatpush.xpose.msra.mxu0 0.0
        %1521 = vmatpush.xpose.msra.mxu0 0.0
        %1522 = vmatpush.xpose.msra.mxu0 0.0
        %1523 = vmatpush.xpose.msra.mxu0 0.0
        %1524 = vmatpush.xpose.msra.mxu0 0.0
        %1525 = vmatpush.xpose.msra.mxu0 0.0
        %1526 = vmatpush.xpose.msra.mxu0 0.0
        %1527 = vmatpush.xpose.msra.mxu0 0.0
        %1528 = vmatpush.xpose.msra.mxu0 0.0
        %v1529 = vand.u32 %v1512, 4294901760
        %1530 = vmatpush.xpose.msra.mxu0 %v1529
        %v1531 = vand.u32 %v1510, 4294901760
        %v1532 = vsub.f32 %v1510, %v1531
        %v1533 = vand.u32 %v1532, 4294901760
        %v1534 = vsub.f32 %v1532, %v1533
        %v1535 = vand.u32 %v1534, 4294901760
        %1536 = vmatmul.f32.gmra.mxu0 %v1535
        %v1537 = vpop.f32.mrf.mxu0
        %v1538 = vadd.f32 %v515, %v1537
        %1539 = vdwg.mxu0
        %1540 = vmatpush.xpose.msra.mxu0 0.0
        %1541 = vmatpush.xpose.msra.mxu0 0.0
        %1542 = vmatpush.xpose.msra.mxu0 0.0
        %1543 = vmatpush.xpose.msra.mxu0 0.0
        %1544 = vmatpush.xpose.msra.mxu0 0.0
        %1545 = vmatpush.xpose.msra.mxu0 0.0
        %1546 = vmatpush.xpose.msra.mxu0 0.0
        %1547 = vmatpush.xpose.msra.mxu0 0.0
        %1548 = vmatpush.xpose.msra.mxu0 0.0
        %1549 = vmatpush.xpose.msra.mxu0 0.0
        %1550 = vmatpush.xpose.msra.mxu0 0.0
        %1551 = vmatpush.xpose.msra.mxu0 0.0
        %1552 = vmatpush.xpose.msra.mxu0 0.0
        %1553 = vmatpush.xpose.msra.mxu0 0.0
        %1554 = vmatpush.xpose.msra.mxu0 0.0
        %v1555 = vand.u32 %v1512, 4294901760
        %v1556 = vsub.f32 %v1512, %v1555
        %v1557 = vand.u32 %v1556, 4294901760
        %v1558 = vsub.f32 %v1556, %v1557
        %v1559 = vand.u32 %v1558, 4294901760
        %1560 = vmatpush.xpose.msra.mxu0 %v1559
        %v1561 = vand.u32 %v1510, 4294901760
        %1562 = vmatmul.f32.gmra.mxu0 %v1561
        %v1563 = vpop.f32.mrf.mxu0
        %v1564 = vadd.f32 %v1538, %v1563
        %1565 = vdwg.mxu0
        %1566 = vmatpush.xpose.msra.mxu0 0.0
        %1567 = vmatpush.xpose.msra.mxu0 0.0
        %1568 = vmatpush.xpose.msra.mxu0 0.0
        %1569 = vmatpush.xpose.msra.mxu0 0.0
        %1570 = vmatpush.xpose.msra.mxu0 0.0
        %1571 = vmatpush.xpose.msra.mxu0 0.0
        %1572 = vmatpush.xpose.msra.mxu0 0.0
        %1573 = vmatpush.xpose.msra.mxu0 0.0
        %1574 = vmatpush.xpose.msra.mxu0 0.0
        %1575 = vmatpush.xpose.msra.mxu0 0.0
        %1576 = vmatpush.xpose.msra.mxu0 0.0
        %1577 = vmatpush.xpose.msra.mxu0 0.0
        %1578 = vmatpush.xpose.msra.mxu0 0.0
        %1579 = vmatpush.xpose.msra.mxu0 0.0
        %1580 = vmatpush.xpose.msra.mxu0 0.0
        %v1581 = vand.u32 %v1512, 4294901760
        %v1582 = vsub.f32 %v1512, %v1581
        %1583 = vmatpush.xpose.msra.mxu0 %v1582
        %v1584 = vand.u32 %v1510, 4294901760
        %v1585 = vsub.f32 %v1510, %v1584
        %1586 = vmatmul.f32.gmra.mxu0 %v1585
        %v1587 = vpop.f32.mrf.mxu0
        %v1588 = vadd.f32 %v1564, %v1587
        %1589 = vdwg.mxu0
        %1590 = vmatpush.xpose.msra.mxu0 0.0
        %1591 = vmatpush.xpose.msra.mxu0 0.0
        %1592 = vmatpush.xpose.msra.mxu0 0.0
        %1593 = vmatpush.xpose.msra.mxu0 0.0
        %1594 = vmatpush.xpose.msra.mxu0 0.0
        %1595 = vmatpush.xpose.msra.mxu0 0.0
        %1596 = vmatpush.xpose.msra.mxu0 0.0
        %1597 = vmatpush.xpose.msra.mxu0 0.0
        %1598 = vmatpush.xpose.msra.mxu0 0.0
        %1599 = vmatpush.xpose.msra.mxu0 0.0
        %1600 = vmatpush.xpose.msra.mxu0 0.0
        %1601 = vmatpush.xpose.msra.mxu0 0.0
        %1602 = vmatpush.xpose.msra.mxu0 0.0
        %1603 = vmatpush.xpose.msra.mxu0 0.0
        %1604 = vmatpush.xpose.msra.mxu0 0.0
        %v1605 = vand.u32 %v1512, 4294901760
        %1606 = vmatpush.xpose.msra.mxu0 %v1605
        %v1607 = vand.u32 %v1510, 4294901760
        %v1608 = vsub.f32 %v1510, %v1607
        %v1609 = vand.u32 %v1608, 4294901760
        %1610 = vmatmul.f32.gmra.mxu0 %v1609
        %v1611 = vpop.f32.mrf.mxu0
        %v1612 = vadd.f32 %v1588, %v1611
        %1613 = vdwg.mxu0
        %1614 = vmatpush.xpose.msra.mxu0 0.0
        %1615 = vmatpush.xpose.msra.mxu0 0.0
        %1616 = vmatpush.xpose.msra.mxu0 0.0
        %1617 = vmatpush.xpose.msra.mxu0 0.0
        %1618 = vmatpush.xpose.msra.mxu0 0.0
        %1619 = vmatpush.xpose.msra.mxu0 0.0
        %1620 = vmatpush.xpose.msra.mxu0 0.0
        %1621 = vmatpush.xpose.msra.mxu0 0.0
        %1622 = vmatpush.xpose.msra.mxu0 0.0
        %1623 = vmatpush.xpose.msra.mxu0 0.0
        %1624 = vmatpush.xpose.msra.mxu0 0.0
        %1625 = vmatpush.xpose.msra.mxu0 0.0
        %1626 = vmatpush.xpose.msra.mxu0 0.0
        %1627 = vmatpush.xpose.msra.mxu0 0.0
        %1628 = vmatpush.xpose.msra.mxu0 0.0
        %v1629 = vand.u32 %v1512, 4294901760
        %v1630 = vsub.f32 %v1512, %v1629
        %v1631 = vand.u32 %v1630, 4294901760
        %1632 = vmatpush.xpose.msra.mxu0 %v1631
        %v1633 = vand.u32 %v1510, 4294901760
        %1634 = vmatmul.f32.gmra.mxu0 %v1633
        %v1635 = vpop.f32.mrf.mxu0
        %v1636 = vadd.f32 %v1612, %v1635
        %1637 = vdwg.mxu0
        %1638 = vmatpush.xpose.msra.mxu0 0.0
        %1639 = vmatpush.xpose.msra.mxu0 0.0
        %1640 = vmatpush.xpose.msra.mxu0 0.0
        %1641 = vmatpush.xpose.msra.mxu0 0.0
        %1642 = vmatpush.xpose.msra.mxu0 0.0
        %1643 = vmatpush.xpose.msra.mxu0 0.0
        %1644 = vmatpush.xpose.msra.mxu0 0.0
        %1645 = vmatpush.xpose.msra.mxu0 0.0
        %1646 = vmatpush.xpose.msra.mxu0 0.0
        %1647 = vmatpush.xpose.msra.mxu0 0.0
        %1648 = vmatpush.xpose.msra.mxu0 0.0
        %1649 = vmatpush.xpose.msra.mxu0 0.0
        %1650 = vmatpush.xpose.msra.mxu0 0.0
        %1651 = vmatpush.xpose.msra.mxu0 0.0
        %1652 = vmatpush.xpose.msra.mxu0 0.0
        %v1653 = vand.u32 %v1512, 4294901760
        %1654 = vmatpush.xpose.msra.mxu0 %v1653
        %v1655 = vand.u32 %v1510, 4294901760
        %1656 = vmatmul.f32.gmra.mxu0 %v1655
        %v1657 = vpop.f32.mrf.mxu0
        %v1658 = vadd.f32 %v1636, %v1657
        %1659 = vdwg.mxu0
        %v1660 = vsel %vm519, %v1658, -inf
        %1661 = vmax.xlane.f32.xlu0 %v1660
        %v1662 = vpop.xlane.xlu0 %1661
        %v1663 = vsub.f32 %v1658, %v1662
        %v1664 = vmul.f32 %v1663, 1.442695
        %v1665 = vpow.pop %v1664
        %v1666 = vsel %vm519, %v1665, 0.0
        %1667 = vadd.xlane.f32.xlu0 %v1666
        %v1668 = vpop.xlane.xlu0 %1667
        %v1669 = vrcp.pop %v1668
        %v1670 = vmul.f32 %v1668, %v1669
        %v1671 = vsub.f32 1.0, %v1670
        %v1672 = vmul.f32 %v1669, %v1671
        %v1673 = vadd.f32 %v1669, %v1672
        %vm1674 = vweird.f32 %v1668
        %vm1675 = vweird.f32 %v1669
        %vm1676 = vmor %vm1674, %vm1675
        %v1677 = vsel %vm1676, %v1669, %v1673
        %v1678 = vand.u32 2147483647, %v1668
        %vm1679 = vcmp.eq.f32.partialorder %v1678, 8.507059e+37
        %v1680 = vand.u32 %v1668, 2147483648
        %v1681 = vor.u32 1.1754944e-38, %v1680
        %v1682 = vsel %vm1679, %v1681, %v1677
        %v1683 = vmul.f32 %v1665, %v1682
        %1684 = vrot.lane.b32.xlu0 %v513, 40
        %v1685 = vpop.permute.xlu0 %1684
        %v1688 = vsel %vm519, %v1683, 0
        %1690 = vmatpush.msra.mxu0 0.0
        %1691 = vmatpush.msra.mxu0 0.0
        %1692 = vmatpush.msra.mxu0 0.0
        %1693 = vmatpush.msra.mxu0 0.0
        %1694 = vmatpush.msra.mxu0 0.0
        %1695 = vmatpush.msra.mxu0 0.0
        %1696 = vmatpush.msra.mxu0 0.0
        %1697 = vmatpush.msra.mxu0 0.0
        %1698 = vmatpush.msra.mxu0 0.0
        %1699 = vmatpush.msra.mxu0 0.0
        %1700 = vmatpush.msra.mxu0 0.0
        %1701 = vmatpush.msra.mxu0 0.0
        %1702 = vmatpush.msra.mxu0 0.0
        %1703 = vmatpush.msra.mxu0 0.0
        %1704 = vmatpush.msra.mxu0 0.0
        %v1705 = vand.u32 %v1685, 4294901760
        %1706 = vmatpush.msra.mxu0 %v1705
        %v1707 = vand.u32 %v1688, 4294901760
        %v1708 = vsub.f32 %v1688, %v1707
        %v1709 = vand.u32 %v1708, 4294901760
        %v1710 = vsub.f32 %v1708, %v1709
        %v1711 = vand.u32 %v1710, 4294901760
        %1712 = vmatmul.f32.gmra.mxu0 %v1711
        %v1713 = vpop.f32.mrf.mxu0
        %v1714 = vadd.f32 0.0, %v1713
        %1715 = vdwg.mxu0
        %1716 = vmatpush.msra.mxu0 0.0
        %1717 = vmatpush.msra.mxu0 0.0
        %1718 = vmatpush.msra.mxu0 0.0
        %1719 = vmatpush.msra.mxu0 0.0
        %1720 = vmatpush.msra.mxu0 0.0
        %1721 = vmatpush.msra.mxu0 0.0
        %1722 = vmatpush.msra.mxu0 0.0
        %1723 = vmatpush.msra.mxu0 0.0
        %1724 = vmatpush.msra.mxu0 0.0
        %1725 = vmatpush.msra.mxu0 0.0
        %1726 = vmatpush.msra.mxu0 0.0
        %1727 = vmatpush.msra.mxu0 0.0
        %1728 = vmatpush.msra.mxu0 0.0
        %1729 = vmatpush.msra.mxu0 0.0
        %1730 = vmatpush.msra.mxu0 0.0
        %v1731 = vand.u32 %v1685, 4294901760
        %v1732 = vsub.f32 %v1685, %v1731
        %v1733 = vand.u32 %v1732, 4294901760
        %v1734 = vsub.f32 %v1732, %v1733
        %v1735 = vand.u32 %v1734, 4294901760
        %1736 = vmatpush.msra.mxu0 %v1735
        %v1737 = vand.u32 %v1688, 4294901760
        %1738 = vmatmul.f32.gmra.mxu0 %v1737
        %v1739 = vpop.f32.mrf.mxu0
        %v1740 = vadd.f32 %v1714, %v1739
        %1741 = vdwg.mxu0
        %1742 = vmatpush.msra.mxu0 0.0
        %1743 = vmatpush.msra.mxu0 0.0
        %1744 = vmatpush.msra.mxu0 0.0
        %1745 = vmatpush.msra.mxu0 0.0
        %1746 = vmatpush.msra.mxu0 0.0
        %1747 = vmatpush.msra.mxu0 0.0
        %1748 = vmatpush.msra.mxu0 0.0
        %1749 = vmatpush.msra.mxu0 0.0
        %1750 = vmatpush.msra.mxu0 0.0
        %1751 = vmatpush.msra.mxu0 0.0
        %1752 = vmatpush.msra.mxu0 0.0
        %1753 = vmatpush.msra.mxu0 0.0
        %1754 = vmatpush.msra.mxu0 0.0
        %1755 = vmatpush.msra.mxu0 0.0
        %1756 = vmatpush.msra.mxu0 0.0
        %v1757 = vand.u32 %v1685, 4294901760
        %v1758 = vsub.f32 %v1685, %v1757
        %1759 = vmatpush.msra.mxu0 %v1758
        %v1760 = vand.u32 %v1688, 4294901760
        %v1761 = vsub.f32 %v1688, %v1760
        %1762 = vmatmul.f32.gmra.mxu0 %v1761
        %v1763 = vpop.f32.mrf.mxu0
        %v1764 = vadd.f32 %v1740, %v1763
        %1765 = vdwg.mxu0
        %1766 = vmatpush.msra.mxu0 0.0
        %1767 = vmatpush.msra.mxu0 0.0
        %1768 = vmatpush.msra.mxu0 0.0
        %1769 = vmatpush.msra.mxu0 0.0
        %1770 = vmatpush.msra.mxu0 0.0
        %1771 = vmatpush.msra.mxu0 0.0
        %1772 = vmatpush.msra.mxu0 0.0
        %1773 = vmatpush.msra.mxu0 0.0
        %1774 = vmatpush.msra.mxu0 0.0
        %1775 = vmatpush.msra.mxu0 0.0
        %1776 = vmatpush.msra.mxu0 0.0
        %1777 = vmatpush.msra.mxu0 0.0
        %1778 = vmatpush.msra.mxu0 0.0
        %1779 = vmatpush.msra.mxu0 0.0
        %1780 = vmatpush.msra.mxu0 0.0
        %v1781 = vand.u32 %v1685, 4294901760
        %1782 = vmatpush.msra.mxu0 %v1781
        %v1783 = vand.u32 %v1688, 4294901760
        %v1784 = vsub.f32 %v1688, %v1783
        %v1785 = vand.u32 %v1784, 4294901760
        %1786 = vmatmul.f32.gmra.mxu0 %v1785
        %v1787 = vpop.f32.mrf.mxu0
        %v1788 = vadd.f32 %v1764, %v1787
        %1789 = vdwg.mxu0
        %1790 = vmatpush.msra.mxu0 0.0
        %1791 = vmatpush.msra.mxu0 0.0
        %1792 = vmatpush.msra.mxu0 0.0
        %1793 = vmatpush.msra.mxu0 0.0
        %1794 = vmatpush.msra.mxu0 0.0
        %1795 = vmatpush.msra.mxu0 0.0
        %1796 = vmatpush.msra.mxu0 0.0
        %1797 = vmatpush.msra.mxu0 0.0
        %1798 = vmatpush.msra.mxu0 0.0
        %1799 = vmatpush.msra.mxu0 0.0
        %1800 = vmatpush.msra.mxu0 0.0
        %1801 = vmatpush.msra.mxu0 0.0
        %1802 = vmatpush.msra.mxu0 0.0
        %1803 = vmatpush.msra.mxu0 0.0
        %1804 = vmatpush.msra.mxu0 0.0
        %v1805 = vand.u32 %v1685, 4294901760
        %v1806 = vsub.f32 %v1685, %v1805
        %v1807 = vand.u32 %v1806, 4294901760
        %1808 = vmatpush.msra.mxu0 %v1807
        %v1809 = vand.u32 %v1688, 4294901760
        %1810 = vmatmul.f32.gmra.mxu0 %v1809
        %v1811 = vpop.f32.mrf.mxu0
        %v1812 = vadd.f32 %v1788, %v1811
        %1813 = vdwg.mxu0
        %1814 = vmatpush.msra.mxu0 0.0
        %1815 = vmatpush.msra.mxu0 0.0
        %1816 = vmatpush.msra.mxu0 0.0
        %1817 = vmatpush.msra.mxu0 0.0
        %1818 = vmatpush.msra.mxu0 0.0
        %1819 = vmatpush.msra.mxu0 0.0
        %1820 = vmatpush.msra.mxu0 0.0
        %1821 = vmatpush.msra.mxu0 0.0
        %1822 = vmatpush.msra.mxu0 0.0
        %1823 = vmatpush.msra.mxu0 0.0
        %1824 = vmatpush.msra.mxu0 0.0
        %1825 = vmatpush.msra.mxu0 0.0
        %1826 = vmatpush.msra.mxu0 0.0
        %1827 = vmatpush.msra.mxu0 0.0
        %1828 = vmatpush.msra.mxu0 0.0
        %v1829 = vand.u32 %v1685, 4294901760
        %1830 = vmatpush.msra.mxu0 %v1829
        %v1831 = vand.u32 %v1688, 4294901760
        %1832 = vmatmul.f32.gmra.mxu0 %v1831
        %v1833 = vpop.f32.mrf.mxu0
        %v1834 = vadd.f32 %v1812, %v1833
        %1835 = vdwg.mxu0
        %1837 = vrot.lane.b32.xlu0 %v1174, 8
        %v1838 = vpop.permute.xlu0 %1837
        %1841 = vrot.lane.b32.xlu0 %v1504, 16
        %v1842 = vpop.permute.xlu0 %1841
        %1845 = vrot.lane.b32.xlu0 %v1834, 24
        %v1846 = vpop.permute.xlu0 %1845
        %v1848 = vsel %vm519, %v844, %v1838
        %vm1849 = vcmask 130048
        %v1850 = vsel %vm1849, %v1848, %v1842
        %vm1851 = vcmask 195584
        %v1852 = vsel %vm1851, %v1850, %v1846
        %v1853 = vld [vmem:[#allocation7] sm:$0xff]
        %v1854 = vld [vmem:[#allocation7 + $0x8] sm:$0xff]
        %v1855 = vld [vmem:[#allocation7 + $0x10] sm:$0xff]
        %v1856 = vld [vmem:[#allocation7 + $0x18] sm:$0xff]
        %v1857 = vld [vmem:[%s4] sm:$0x1]
        %v1859 = vperm.slane %v1857, 0
        %v1862 = vsel %vm326, %v1852, 0
        %1864 = vmatpush.msra.mxu0 0.0
        %1865 = vmatpush.msra.mxu0 0.0
        %1866 = vmatpush.msra.mxu0 0.0
        %1867 = vmatpush.msra.mxu0 0.0
        %1868 = vmatpush.msra.mxu0 0.0
        %1869 = vmatpush.msra.mxu0 0.0
        %1870 = vmatpush.msra.mxu0 0.0
        %1871 = vmatpush.msra.mxu0 0.0
        %1872 = vmatpush.msra.mxu0 0.0
        %1873 = vmatpush.msra.mxu0 0.0
        %1874 = vmatpush.msra.mxu0 0.0
        %1875 = vmatpush.msra.mxu0 0.0
        %v1876 = vand.u32 %v1856, 4294901760
        %1877 = vmatpush.msra.mxu0 %v1876
        %v1878 = vand.u32 %v1855, 4294901760
        %1879 = vmatpush.msra.mxu0 %v1878
        %v1880 = vand.u32 %v1854, 4294901760
        %1881 = vmatpush.msra.mxu0 %v1880
        %v1882 = vand.u32 %v1853, 4294901760
        %1883 = vmatpush.msra.mxu0 %v1882
        %v1884 = vand.u32 %v1862, 4294901760
        %v1885 = vsub.f32 %v1862, %v1884
        %v1886 = vand.u32 %v1885, 4294901760
        %v1887 = vsub.f32 %v1885, %v1886
        %v1888 = vand.u32 %v1887, 4294901760
        %1889 = vmatmul.f32.gmra.mxu0 %v1888
        %v1890 = vpop.f32.mrf.mxu0
        %v1891 = vadd.f32 %v1859, %v1890
        %1892 = vdwg.mxu0
        %1893 = vmatpush.msra.mxu0 0.0
        %1894 = vmatpush.msra.mxu0 0.0
        %1895 = vmatpush.msra.mxu0 0.0
        %1896 = vmatpush.msra.mxu0 0.0
        %1897 = vmatpush.msra.mxu0 0.0
        %1898 = vmatpush.msra.mxu0 0.0
        %1899 = vmatpush.msra.mxu0 0.0
        %1900 = vmatpush.msra.mxu0 0.0
        %1901 = vmatpush.msra.mxu0 0.0
        %1902 = vmatpush.msra.mxu0 0.0
        %1903 = vmatpush.msra.mxu0 0.0
        %1904 = vmatpush.msra.mxu0 0.0
        %v1905 = vand.u32 %v1856, 4294901760
        %v1906 = vsub.f32 %v1856, %v1905
        %v1907 = vand.u32 %v1906, 4294901760
        %v1908 = vsub.f32 %v1906, %v1907
        %v1909 = vand.u32 %v1908, 4294901760
        %1910 = vmatpush.msra.mxu0 %v1909
        %v1911 = vand.u32 %v1855, 4294901760
        %v1912 = vsub.f32 %v1855, %v1911
        %v1913 = vand.u32 %v1912, 4294901760
        %v1914 = vsub.f32 %v1912, %v1913
        %v1915 = vand.u32 %v1914, 4294901760
        %1916 = vmatpush.msra.mxu0 %v1915
        %v1917 = vand.u32 %v1854, 4294901760
        %v1918 = vsub.f32 %v1854, %v1917
        %v1919 = vand.u32 %v1918, 4294901760
        %v1920 = vsub.f32 %v1918, %v1919
        %v1921 = vand.u32 %v1920, 4294901760
        %1922 = vmatpush.msra.mxu0 %v1921
        %v1923 = vand.u32 %v1853, 4294901760
        %v1924 = vsub.f32 %v1853, %v1923
        %v1925 = vand.u32 %v1924, 4294901760
        %v1926 = vsub.f32 %v1924, %v1925
        %v1927 = vand.u32 %v1926, 4294901760
        %1928 = vmatpush.msra.mxu0 %v1927
        %v1929 = vand.u32 %v1862, 4294901760
        %1930 = vmatmul.f32.gmra.mxu0 %v1929
        %v1931 = vpop.f32.mrf.mxu0
        %v1932 = vadd.f32 %v1891, %v1931
        %1933 = vdwg.mxu0
        %1934 = vmatpush.msra.mxu0 0.0
        %1935 = vmatpush.msra.mxu0 0.0
        %1936 = vmatpush.msra.mxu0 0.0
        %1937 = vmatpush.msra.mxu0 0.0
        %1938 = vmatpush.msra.mxu0 0.0
        %1939 = vmatpush.msra.mxu0 0.0
        %1940 = vmatpush.msra.mxu0 0.0
        %1941 = vmatpush.msra.mxu0 0.0
        %1942 = vmatpush.msra.mxu0 0.0
        %1943 = vmatpush.msra.mxu0 0.0
        %1944 = vmatpush.msra.mxu0 0.0
        %1945 = vmatpush.msra.mxu0 0.0
        %v1946 = vand.u32 %v1856, 4294901760
        %v1947 = vsub.f32 %v1856, %v1946
        %1948 = vmatpush.msra.mxu0 %v1947
        %v1949 = vand.u32 %v1855, 4294901760
        %v1950 = vsub.f32 %v1855, %v1949
        %1951 = vmatpush.msra.mxu0 %v1950
        %v1952 = vand.u32 %v1854, 4294901760
        %v1953 = vsub.f32 %v1854, %v1952
        %1954 = vmatpush.msra.mxu0 %v1953
        %v1955 = vand.u32 %v1853, 4294901760
        %v1956 = vsub.f32 %v1853, %v1955
        %1957 = vmatpush.msra.mxu0 %v1956
        %v1958 = vand.u32 %v1862, 4294901760
        %v1959 = vsub.f32 %v1862, %v1958
        %1960 = vmatmul.f32.gmra.mxu0 %v1959
        %v1961 = vpop.f32.mrf.mxu0
        %v1962 = vadd.f32 %v1932, %v1961
        %1963 = vdwg.mxu0
        %1964 = vmatpush.msra.mxu0 0.0
        %1965 = vmatpush.msra.mxu0 0.0
        %1966 = vmatpush.msra.mxu0 0.0
        %1967 = vmatpush.msra.mxu0 0.0
        %1968 = vmatpush.msra.mxu0 0.0
        %1969 = vmatpush.msra.mxu0 0.0
        %1970 = vmatpush.msra.mxu0 0.0
        %1971 = vmatpush.msra.mxu0 0.0
        %1972 = vmatpush.msra.mxu0 0.0
        %1973 = vmatpush.msra.mxu0 0.0
        %1974 = vmatpush.msra.mxu0 0.0
        %1975 = vmatpush.msra.mxu0 0.0
        %v1976 = vand.u32 %v1856, 4294901760
        %1977 = vmatpush.msra.mxu0 %v1976
        %v1978 = vand.u32 %v1855, 4294901760
        %1979 = vmatpush.msra.mxu0 %v1978
        %v1980 = vand.u32 %v1854, 4294901760
        %1981 = vmatpush.msra.mxu0 %v1980
        %v1982 = vand.u32 %v1853, 4294901760
        %1983 = vmatpush.msra.mxu0 %v1982
        %v1984 = vand.u32 %v1862, 4294901760
        %v1985 = vsub.f32 %v1862, %v1984
        %v1986 = vand.u32 %v1985, 4294901760
        %1987 = vmatmul.f32.gmra.mxu0 %v1986
        %v1988 = vpop.f32.mrf.mxu0
        %v1989 = vadd.f32 %v1962, %v1988
        %1990 = vdwg.mxu0
        %1991 = vmatpush.msra.mxu0 0.0
        %1992 = vmatpush.msra.mxu0 0.0
        %1993 = vmatpush.msra.mxu0 0.0
        %1994 = vmatpush.msra.mxu0 0.0
        %1995 = vmatpush.msra.mxu0 0.0
        %1996 = vmatpush.msra.mxu0 0.0
        %1997 = vmatpush.msra.mxu0 0.0
        %1998 = vmatpush.msra.mxu0 0.0
        %1999 = vmatpush.msra.mxu0 0.0
        %2000 = vmatpush.msra.mxu0 0.0
        %2001 = vmatpush.msra.mxu0 0.0
        %2002 = vmatpush.msra.mxu0 0.0
        %v2003 = vand.u32 %v1856, 4294901760
        %v2004 = vsub.f32 %v1856, %v2003
        %v2005 = vand.u32 %v2004, 4294901760
        %2006 = vmatpush.msra.mxu0 %v2005
        %v2007 = vand.u32 %v1855, 4294901760
        %v2008 = vsub.f32 %v1855, %v2007
        %v2009 = vand.u32 %v2008, 4294901760
        %2010 = vmatpush.msra.mxu0 %v2009
        %v2011 = vand.u32 %v1854, 4294901760
        %v2012 = vsub.f32 %v1854, %v2011
        %v2013 = vand.u32 %v2012, 4294901760
        %2014 = vmatpush.msra.mxu0 %v2013
        %v2015 = vand.u32 %v1853, 4294901760
        %v2016 = vsub.f32 %v1853, %v2015
        %v2017 = vand.u32 %v2016, 4294901760
        %2018 = vmatpush.msra.mxu0 %v2017
        %v2019 = vand.u32 %v1862, 4294901760
        %2020 = vmatmul.f32.gmra.mxu0 %v2019
        %v2021 = vpop.f32.mrf.mxu0
        %v2022 = vadd.f32 %v1989, %v2021
        %2023 = vdwg.mxu0
        %2024 = vmatpush.msra.mxu0 0.0
        %2025 = vmatpush.msra.mxu0 0.0
        %2026 = vmatpush.msra.mxu0 0.0
        %2027 = vmatpush.msra.mxu0 0.0
        %2028 = vmatpush.msra.mxu0 0.0
        %2029 = vmatpush.msra.mxu0 0.0
        %2030 = vmatpush.msra.mxu0 0.0
        %2031 = vmatpush.msra.mxu0 0.0
        %2032 = vmatpush.msra.mxu0 0.0
        %2033 = vmatpush.msra.mxu0 0.0
        %2034 = vmatpush.msra.mxu0 0.0
        %2035 = vmatpush.msra.mxu0 0.0
        %v2036 = vand.u32 %v1856, 4294901760
        %2037 = vmatpush.msra.mxu0 %v2036
        %v2038 = vand.u32 %v1855, 4294901760
        %2039 = vmatpush.msra.mxu0 %v2038
        %v2040 = vand.u32 %v1854, 4294901760
        %2041 = vmatpush.msra.mxu0 %v2040
        %v2042 = vand.u32 %v1853, 4294901760
        %2043 = vmatpush.msra.mxu0 %v2042
        %v2044 = vand.u32 %v1862, 4294901760
        %2045 = vmatmul.f32.gmra.mxu0 %v2044
        %v2046 = vpop.f32.mrf.mxu0
        %v2047 = vadd.f32 %v2022, %v2046
        %2048 = vdwg.mxu0
        %2049 = vst.msk [vmem:[%s316] sm:$0xff] %vm326, %v2047
        %s2050 = sand.u32 %s164, 1
        %s2051 = scalar_lea.sflag [#allocation4], %s2050
        %s2052 = sand.u32 %s164, 1
        %s2053 = smul.addr %s2052, 8
        %s2054 = scalar_lea.vmem [#allocation10], %s2053
        // Predicated region
        $region61: #{tpu_custom_call.1} parent=43 // pred_check
          %p2055 = pneg %p174
        $region62: #{tpu_custom_call.1} parent=43 // pred_check_branch
          %2057 = sbr.rel (%p2055) target = $region64
        $region63: #{tpu_custom_call.1} parent=43 // pred_region
          %2059 = vsyncadd %s2051, 0
          %s2060 = smul.addr %s25, 8
          %s2061 = scalar_lea.hbm %s6, %s2060
          %s2063 = sshll.u32 %s2054, 4
          %s2064 = int_to_ptr.vmem [resolvable:$true] %s2063
          %s2065 = sshll.u32 %s2061, 4
          %s2066 = int_to_ptr.hbm [resolvable:$true] %s2065
          %2068 = dma.vmem_to_hbm [thread:$0]  %s2064, 128, %s2066, %s2051
        $region64: #{tpu_custom_call.1} parent=43 // pred_fallthru
          _
      $region44: #{tpu_custom_call.1} parent=5 // pred_fallthru
        _
      %p2069 = scmp.le.s32.totalorder 2, %s20
      // Predicated region
      $region65: #{tpu_custom_call.1} parent=5 // pred_check
        %p2070 = pneg %p2069
      $region66: #{tpu_custom_call.1} parent=5 // pred_check_branch
        %2072 = sbr.rel (%p2070) target = $region68
      $region67: #{tpu_custom_call.1} parent=5 // pred_region
        %s2073 = ssub.s32 %s20, 2
        // Predicated region
        $region69: #{tpu_custom_call.1} parent=67 // pred_check
          %p2074 = pneg %p180
        $region70: #{tpu_custom_call.1} parent=67 // pred_check_branch
          %2076 = sbr.rel (%p2074) target = $region72
        $region71: #{tpu_custom_call.1} parent=67 // pred_region
          %s2077 = sand.u32 %s165, 1
          %s2078 = scalar_lea.sflag [#allocation4], %s2077
          %s2079 = sand.u32 %s165, 1
          %s2080 = smul.addr %s2079, 8
          %s2081 = scalar_lea.vmem [#allocation10], %s2080
          %2083 = dma.done %s2078, 128
        $region72: #{tpu_custom_call.1} parent=67 // pred_fallthru
          _
      $region68: #{tpu_custom_call.1} parent=5 // pred_fallthru
        _
    $region6: #{tpu_custom_call.1} parent=1 // loop_footer
      %s24 = sadd.s32 1, %s20
    $region7: #{tpu_custom_call.1} parent=1 // loop_footer_branch
      %19 = sbr.rel target = $region3
    $region8: #{tpu_custom_call.1} parent=1 // loop_exit
      _
    %2084 = vsyncpa [#allocation3], 1
    %s2085 = scalar_lea.sflag [#allocation3], 1
    %2086 = vsyncpa %s2085, 1
    %2087 = vsyncpa [#allocation6], 1
    %2088 = vsyncpa [#allocation9], 1
    %2089 = vsyncpa [#allocation4], 1
    %s2090 = scalar_lea.sflag [#allocation4], 1
    %2091 = vsyncpa %s2090, 1

</llo_original>
